<compile_context>
chip_gen: v7x
topology: tpu7x:2x2x1
jax: 0.10.0
libtpu: 0.0.40
codegen_flags: <defaults>
</compile_context>

<pallas_src>
import functools
import math

import numpy as np
import jax
import jax.numpy as jnp
from jax.experimental import pallas as pl
from jax.experimental.pallas import tpu as pltpu

CHN = 12
HIDDEN = 96


def ca_kernel(x_ref, mask_ref, w1_ref, b1_ref, w2_ref, o_ref, *, W, bb):
    """One batch-block per grid step.

    x_ref    : (bb, CHN, P)      input state, P = H*W
    mask_ref : (bb, 1,  P)       stochastic update mask (0/1)
    w1_ref   : (HIDDEN, 4*CHN)   w1 regrouped to [x | sob_x | sob_y | lap], bf16
    b1_ref   : (HIDDEN, 1)       w1 bias, f32
    w2_ref   : (CHN, HIDDEN)     w2 (no bias), bf16
    o_ref    : (bb, CHN, P)      output state
    """
    P = x_ref.shape[-1]

    # Column-wrap masks as (1, P); jnp.where broadcasts them over channels.
    col = jax.lax.broadcasted_iota(jnp.int32, (1, P), 1) % W
    is_first = col == 0
    is_last = col == (W - 1)

    def rot(v, k):
        # result[p] = v[(p - k) % P]  (flat lane rotation)
        return jnp.roll(v, k, axis=-1)

    def col_plus(v):
        # result[i, j] = v[i, (j + 1) % W]
        return jnp.where(is_last, rot(v, W - 1), rot(v, -1))

    def col_minus(v):
        # result[i, j] = v[i, (j - 1) % W]
        return jnp.where(is_first, rot(v, -(W - 1)), rot(v, 1))

    xs = []
    feats_per_img = []
    for b in range(bb):
        x = x_ref[b]                       # (CHN, P) f32
        # Row (vertical) shifts: flat +-W roll wraps circularly inside the image.
        up = rot(x, W)                     # x[i-1, j]
        dn = rot(x, -W)                    # x[i+1, j]
        rb = up + 2.0 * x + dn             # vertical blur
        rd = dn - up                       # vertical diff
        rb_l, rb_r = col_minus(rb), col_plus(rb)
        rd_l, rd_r = col_minus(rd), col_plus(rd)
        # Separable forms of the cross-correlation (torch conv2d) stencils.
        sob_x = rb_r - rb_l
        sob_y = rd_l + 2.0 * rd + rd_r
        lap = rb_l + 2.0 * rb + rb_r - 16.0 * x
        xs.append(x)
        feats_per_img.append(jnp.concatenate([x, sob_x, sob_y, lap], axis=0))  # (4*CHN, P)

    # Lane-concat the per-image feature slabs -> one wide MXU matmul (N = bb*P).
    feats = feats_per_img[0] if bb == 1 else jnp.concatenate(feats_per_img, axis=1)
    feats = feats.astype(w1_ref.dtype)     # bf16 MXU inputs; stencil math stays f32

    acc = jnp.dot(w1_ref[...], feats, preferred_element_type=jnp.float32)   # (HIDDEN, bb*P)
    h = jnp.maximum(acc + b1_ref[...], 0.0).astype(w2_ref.dtype)
    delta = jnp.dot(w2_ref[...], h, preferred_element_type=jnp.float32)     # (CHN, bb*P)
    # NOTE: for large P (e.g. 256x256 images) chunk the w1->relu->w2 pipeline
    # over lane tiles instead of materializing (HIDDEN, bb*P) in full (v7x VMEM).

    for b in range(bb):
        d_b = delta if bb == 1 else delta[:, b * P:(b + 1) * P]
        o_ref[b] = (xs[b] + d_b * mask_ref[b]).astype(o_ref.dtype)


def ca_forward(params, x, key, update_rate=0.5, noise=None, batch_block=2):
    """CA.forward: x is NCHW (b, chn, h, w), float32."""
    b, chn, H, W = x.shape
    hidden = params["w1"].shape[0]

    if noise is not None:
        key, nk = jax.random.split(key)
        x = x + jax.random.normal(nk, x.shape, x.dtype) * noise

    # TODO(synk): the stochastic update mask / noise RNG stays in plain JAX
    # (glue outside the kernel); mask = floor(rand(b,1,h,w) + update_rate).
    mask = jnp.floor(jax.random.uniform(key, (b, 1, H, W), jnp.float32) + update_rate)

    P = H * W
    # NOTE: P=H*W should be a multiple of 128 for unmasked lane-dense stores
    # (true for the module's default 128x128 / the 16x16 demo).
    x_flat = x.reshape(b, chn, P)
    mask_flat = mask.reshape(b, 1, P)

    # torch w1 input-channel order is interleaved (c*4 + f); regroup columns to
    # [x | sob_x | sob_y | lap] blocks of `chn` each -> (hidden, 4*chn), bf16.
    w1_flat = jnp.transpose(params["w1"].reshape(hidden, chn, 4), (0, 2, 1))
    w1_flat = w1_flat.reshape(hidden, 4 * chn).astype(jnp.bfloat16)
    b1_col = params["b1"].reshape(hidden, 1).astype(jnp.float32)
    w2 = params["w2"].astype(jnp.bfloat16)

    bb = max(1, math.gcd(b, batch_block))   # batch elements per grid step
    grid = (b // bb,)

    kernel = functools.partial(ca_kernel, W=W, bb=bb)
    out = pl.pallas_call(
        kernel,
        out_shape=jax.ShapeDtypeStruct((b, chn, P), x.dtype),
        grid_spec=pltpu.PrefetchScalarGridSpec(
            num_scalar_prefetch=0,
            grid=grid,
            in_specs=[
                pl.BlockSpec((bb, chn, P), lambda i: (i, 0, 0)),
                pl.BlockSpec((bb, 1, P), lambda i: (i, 0, 0)),
                pl.BlockSpec((hidden, 4 * chn), lambda i: (0, 0)),
                pl.BlockSpec((hidden, 1), lambda i: (0, 0)),
                pl.BlockSpec((chn, hidden), lambda i: (0, 0)),
            ],
            out_specs=pl.BlockSpec((bb, chn, P), lambda i: (i, 0, 0)),
        ),
        compiler_params=pltpu.CompilerParams(dimension_semantics=("parallel",)),
    )(x_flat, mask_flat, w1_flat, b1_col, w2)
    return out.reshape(b, chn, H, W)


def ca_forward_ref(params, x, key, update_rate=0.5, noise=None):
    """Pure-JAX reference mirroring the PyTorch module (f32 end to end)."""
    b, chn, H, W = x.shape
    if noise is not None:
        key, nk = jax.random.split(key)
        x = x + jax.random.normal(nk, x.shape, x.dtype) * noise

    def s(di, dj):
        return jnp.roll(x, shift=(-di, -dj), axis=(2, 3))

    sob_x = (s(-1, 1) - s(-1, -1)) + 2.0 * (s(0, 1) - s(0, -1)) + (s(1, 1) - s(1, -1))
    sob_y = (s(1, -1) - s(-1, -1)) + 2.0 * (s(1, 0) - s(-1, 0)) + (s(1, 1) - s(-1, 1))
    lap = (s(-1, -1) + 2.0 * s(-1, 0) + s(-1, 1)
           + 2.0 * s(0, -1) - 12.0 * x + 2.0 * s(0, 1)
           + s(1, -1) + 2.0 * s(1, 0) + s(1, 1))
    y = jnp.stack([x, sob_x, sob_y, lap], axis=2).reshape(b, chn * 4, H, W)

    h = jnp.einsum("oc,bchw->bohw", params["w1"], y) + params["b1"][None, :, None, None]
    h = jnp.maximum(h, 0.0)
    delta = jnp.einsum("oc,bchw->bohw", params["w2"], h)
    mask = jnp.floor(jax.random.uniform(key, (b, 1, H, W), jnp.float32) + update_rate)
    return x + delta * mask


if __name__ == "__main__":
    key = jax.random.PRNGKey(0)
    k1, k2, k3, kx, km = jax.random.split(key, 5)

    # Deterministic parameter init. Shapes follow CA.__init__ (chn=12, hidden_n=96).
    # NOTE: the PyTorch module zero-initializes w2 (which would make the forward
    # trivially return x); we use small deterministic values so the matmul path
    # in the kernel is actually exercised.
    params = {
        "w1": jax.random.normal(k1, (HIDDEN, CHN * 4), jnp.float32) * 0.1,
        "b1": jax.random.normal(k2, (HIDDEN,), jnp.float32) * 0.1,
        "w2": jax.random.normal(k3, (CHN, HIDDEN), jnp.float32) * 0.05,
    }

    B, H, W = 4, 16, 16
    x = jax.random.normal(kx, (B, CHN, H, W), jnp.float32)

    out = jax.block_until_ready(
        ca_forward(params, x, km, update_rate=0.5, noise=None, batch_block=2))
    ref = jax.block_until_ready(
        ca_forward_ref(params, x, km, update_rate=0.5, noise=None))

    # atol slightly above 3e-2 to absorb bf16 MXU-input rounding (f32 accumulate).
    np.testing.assert_allclose(np.asarray(out), np.asarray(ref), rtol=3e-2, atol=4e-2)
    print("KERNEL_OK")
</pallas_src>

<mosaic_0001>
module attributes {stable_mosaic.version = 11 : i64} {
  func.func @ca_kernel(%arg0: i32, %arg1: memref<2x12x256xf32, #tpu.memory_space<vmem>>, %arg2: memref<2x1x256xf32, #tpu.memory_space<vmem>>, %arg3: memref<96x48xbf16, #tpu.memory_space<vmem>>, %arg4: memref<96x1xf32, #tpu.memory_space<vmem>>, %arg5: memref<12x96xbf16, #tpu.memory_space<vmem>>, %arg6: memref<2x12x256xf32, #tpu.memory_space<vmem>>) attributes {dimension_semantics = [#tpu.dimension_semantics<parallel>], iteration_bounds = array<i64: 2>, scalar_prefetch = 0 : i64, scratch_operands = 0 : i64, tpu.core_type = #tpu.core_type<tc>, window_params = [{transform_indices = @transform_0, window_bounds = array<i64: 2, 12, 256>}, {transform_indices = @transform_1, window_bounds = array<i64: 2, 1, 256>}, {pipeline_mode = #tpu.pipeline_mode<synchronous>, transform_indices = @transform_2, window_bounds = array<i64: 96, 48>}, {pipeline_mode = #tpu.pipeline_mode<synchronous>, transform_indices = @transform_3, window_bounds = array<i64: 96, 1>}, {pipeline_mode = #tpu.pipeline_mode<synchronous>, transform_indices = @transform_4, window_bounds = array<i64: 12, 96>}, {transform_indices = @transform_5, window_bounds = array<i64: 2, 12, 256>}]} {
    %0 = tpu.iota {dimensions = array<i32: 1>} : vector<1x256xi32>
    %c16_i32 = arith.constant 16 : i32
    %c0_i32 = arith.constant 0 : i32
    %1 = arith.cmpi eq, %c16_i32, %c0_i32 : i32
    %c1_i32 = arith.constant 1 : i32
    %2 = arith.select %1, %c1_i32, %c16_i32 : i32
    %3 = vector.broadcast %2 : i32 to vector<1x256xi32>
    %4 = arith.remsi %0, %3 : vector<1x256xi32>
    %c0_i32_0 = arith.constant 0 : i32
    %5 = vector.broadcast %c0_i32_0 : i32 to vector<1x256xi32>
    %6 = arith.cmpi ne, %4, %5 : vector<1x256xi32>
    %c0_i32_1 = arith.constant 0 : i32
    %7 = vector.broadcast %c0_i32_1 : i32 to vector<1x256xi32>
    %8 = arith.cmpi slt, %4, %7 : vector<1x256xi32>
    %c0_i32_2 = arith.constant 0 : i32
    %9 = arith.cmpi slt, %2, %c0_i32_2 : i32
    %10 = vector.broadcast %9 : i1 to vector<1x256xi1>
    %11 = vector.broadcast %10 : vector<1x256xi1> to vector<1x256xi1>
    %12 = arith.xori %8, %11 : vector<1x256xi1>
    %13 = arith.andi %12, %6 : vector<1x256xi1>
    %14 = vector.broadcast %2 : i32 to vector<1x256xi32>
    %15 = arith.addi %4, %14 : vector<1x256xi32>
    %16 = arith.select %13, %15, %4 : vector<1x256xi1>, vector<1x256xi32>
    %c0_i32_3 = arith.constant 0 : i32
    %17 = vector.broadcast %c0_i32_3 : i32 to vector<1x256xi32>
    %18 = arith.cmpi eq, %16, %17 : vector<1x256xi32>
    %c15_i32 = arith.constant 15 : i32
    %19 = vector.broadcast %c15_i32 : i32 to vector<1x256xi32>
    %20 = arith.cmpi eq, %16, %19 : vector<1x256xi32>
    %c0 = arith.constant 0 : index
    %c0_4 = arith.constant 0 : index
    %c0_5 = arith.constant 0 : index
    %21 = vector.load %arg1[%c0, %c0_4, %c0_5] : memref<2x12x256xf32, #tpu.memory_space<vmem>>, vector<1x12x256xf32>
    %22 = vector.shape_cast %21 : vector<1x12x256xf32> to vector<12x256xf32>
    %23 = vector.extract_strided_slice %22 {offsets = [0, 240], sizes = [12, 16], strides = [1, 1]} : vector<12x256xf32> to vector<12x16xf32>
    %24 = vector.extract_strided_slice %22 {offsets = [0, 0], sizes = [12, 240], strides = [1, 1]} : vector<12x256xf32> to vector<12x240xf32>
    %25 = tpu.concatenate %23, %24 in 1 : vector<12x16xf32>, vector<12x240xf32> -> vector<12x256xf32>
    %26 = vector.extract_strided_slice %22 {offsets = [0, 16], sizes = [12, 240], strides = [1, 1]} : vector<12x256xf32> to vector<12x240xf32>
    %27 = vector.extract_strided_slice %22 {offsets = [0, 0], sizes = [12, 16], strides = [1, 1]} : vector<12x256xf32> to vector<12x16xf32>
    %28 = tpu.concatenate %26, %27 in 1 : vector<12x240xf32>, vector<12x16xf32> -> vector<12x256xf32>
    %cst = arith.constant 2.000000e+00 : f32
    %29 = vector.broadcast %cst : f32 to vector<12x256xf32>
    %30 = arith.mulf %29, %22 : vector<12x256xf32>
    %31 = arith.addf %25, %30 : vector<12x256xf32>
    %32 = arith.addf %31, %28 : vector<12x256xf32>
    %33 = arith.subf %28, %25 : vector<12x256xf32>
    %34 = vector.extract_strided_slice %32 {offsets = [0, 15], sizes = [12, 241], strides = [1, 1]} : vector<12x256xf32> to vector<12x241xf32>
    %35 = vector.extract_strided_slice %32 {offsets = [0, 0], sizes = [12, 15], strides = [1, 1]} : vector<12x256xf32> to vector<12x15xf32>
    %36 = tpu.concatenate %34, %35 in 1 : vector<12x241xf32>, vector<12x15xf32> -> vector<12x256xf32>
    %37 = vector.extract_strided_slice %32 {offsets = [0, 255], sizes = [12, 1], strides = [1, 1]} : vector<12x256xf32> to vector<12x1xf32>
    %38 = vector.extract_strided_slice %32 {offsets = [0, 0], sizes = [12, 255], strides = [1, 1]} : vector<12x256xf32> to vector<12x255xf32>
    %39 = tpu.concatenate %37, %38 in 1 : vector<12x1xf32>, vector<12x255xf32> -> vector<12x256xf32>
    %40 = vector.shape_cast %18 : vector<1x256xi1> to vector<1x256xi1>
    %41 = vector.broadcast %40 : vector<1x256xi1> to vector<12x256xi1>
    %42 = arith.select %41, %36, %39 : vector<12x256xi1>, vector<12x256xf32>
    %43 = vector.extract_strided_slice %32 {offsets = [0, 241], sizes = [12, 15], strides = [1, 1]} : vector<12x256xf32> to vector<12x15xf32>
    %44 = vector.extract_strided_slice %32 {offsets = [0, 0], sizes = [12, 241], strides = [1, 1]} : vector<12x256xf32> to vector<12x241xf32>
    %45 = tpu.concatenate %43, %44 in 1 : vector<12x15xf32>, vector<12x241xf32> -> vector<12x256xf32>
    %46 = vector.extract_strided_slice %32 {offsets = [0, 1], sizes = [12, 255], strides = [1, 1]} : vector<12x256xf32> to vector<12x255xf32>
    %47 = vector.extract_strided_slice %32 {offsets = [0, 0], sizes = [12, 1], strides = [1, 1]} : vector<12x256xf32> to vector<12x1xf32>
    %48 = tpu.concatenate %46, %47 in 1 : vector<12x255xf32>, vector<12x1xf32> -> vector<12x256xf32>
    %49 = vector.shape_cast %20 : vector<1x256xi1> to vector<1x256xi1>
    %50 = vector.broadcast %49 : vector<1x256xi1> to vector<12x256xi1>
    %51 = arith.select %50, %45, %48 : vector<12x256xi1>, vector<12x256xf32>
    %52 = vector.extract_strided_slice %33 {offsets = [0, 15], sizes = [12, 241], strides = [1, 1]} : vector<12x256xf32> to vector<12x241xf32>
    %53 = vector.extract_strided_slice %33 {offsets = [0, 0], sizes = [12, 15], strides = [1, 1]} : vector<12x256xf32> to vector<12x15xf32>
    %54 = tpu.concatenate %52, %53 in 1 : vector<12x241xf32>, vector<12x15xf32> -> vector<12x256xf32>
    %55 = vector.extract_strided_slice %33 {offsets = [0, 255], sizes = [12, 1], strides = [1, 1]} : vector<12x256xf32> to vector<12x1xf32>
    %56 = vector.extract_strided_slice %33 {offsets = [0, 0], sizes = [12, 255], strides = [1, 1]} : vector<12x256xf32> to vector<12x255xf32>
    %57 = tpu.concatenate %55, %56 in 1 : vector<12x1xf32>, vector<12x255xf32> -> vector<12x256xf32>
    %58 = vector.shape_cast %18 : vector<1x256xi1> to vector<1x256xi1>
    %59 = vector.broadcast %58 : vector<1x256xi1> to vector<12x256xi1>
    %60 = arith.select %59, %54, %57 : vector<12x256xi1>, vector<12x256xf32>
    %61 = vector.extract_strided_slice %33 {offsets = [0, 241], sizes = [12, 15], strides = [1, 1]} : vector<12x256xf32> to vector<12x15xf32>
    %62 = vector.extract_strided_slice %33 {offsets = [0, 0], sizes = [12, 241], strides = [1, 1]} : vector<12x256xf32> to vector<12x241xf32>
    %63 = tpu.concatenate %61, %62 in 1 : vector<12x15xf32>, vector<12x241xf32> -> vector<12x256xf32>
    %64 = vector.extract_strided_slice %33 {offsets = [0, 1], sizes = [12, 255], strides = [1, 1]} : vector<12x256xf32> to vector<12x255xf32>
    %65 = vector.extract_strided_slice %33 {offsets = [0, 0], sizes = [12, 1], strides = [1, 1]} : vector<12x256xf32> to vector<12x1xf32>
    %66 = tpu.concatenate %64, %65 in 1 : vector<12x255xf32>, vector<12x1xf32> -> vector<12x256xf32>
    %67 = vector.shape_cast %20 : vector<1x256xi1> to vector<1x256xi1>
    %68 = vector.broadcast %67 : vector<1x256xi1> to vector<12x256xi1>
    %69 = arith.select %68, %63, %66 : vector<12x256xi1>, vector<12x256xf32>
    %70 = arith.subf %51, %42 : vector<12x256xf32>
    %cst_6 = arith.constant 2.000000e+00 : f32
    %71 = vector.broadcast %cst_6 : f32 to vector<12x256xf32>
    %72 = arith.mulf %71, %33 : vector<12x256xf32>
    %73 = arith.addf %60, %72 : vector<12x256xf32>
    %74 = arith.addf %73, %69 : vector<12x256xf32>
    %cst_7 = arith.constant 2.000000e+00 : f32
    %75 = vector.broadcast %cst_7 : f32 to vector<12x256xf32>
    %76 = arith.mulf %75, %32 : vector<12x256xf32>
    %77 = arith.addf %42, %76 : vector<12x256xf32>
    %78 = arith.addf %77, %51 : vector<12x256xf32>
    %cst_8 = arith.constant 1.600000e+01 : f32
    %79 = vector.broadcast %cst_8 : f32 to vector<12x256xf32>
    %80 = arith.mulf %79, %22 : vector<12x256xf32>
    %81 = arith.subf %78, %80 : vector<12x256xf32>
    %82 = tpu.concatenate %22, %70, %74, %81 in 0 : vector<12x256xf32>, vector<12x256xf32>, vector<12x256xf32>, vector<12x256xf32> -> vector<48x256xf32>
    %c1 = arith.constant 1 : index
    %c0_9 = arith.constant 0 : index
    %c0_10 = arith.constant 0 : index
    %83 = vector.load %arg1[%c1, %c0_9, %c0_10] : memref<2x12x256xf32, #tpu.memory_space<vmem>>, vector<1x12x256xf32>
    %84 = vector.shape_cast %83 : vector<1x12x256xf32> to vector<12x256xf32>
    %85 = vector.extract_strided_slice %84 {offsets = [0, 240], sizes = [12, 16], strides = [1, 1]} : vector<12x256xf32> to vector<12x16xf32>
    %86 = vector.extract_strided_slice %84 {offsets = [0, 0], sizes = [12, 240], strides = [1, 1]} : vector<12x256xf32> to vector<12x240xf32>
    %87 = tpu.concatenate %85, %86 in 1 : vector<12x16xf32>, vector<12x240xf32> -> vector<12x256xf32>
    %88 = vector.extract_strided_slice %84 {offsets = [0, 16], sizes = [12, 240], strides = [1, 1]} : vector<12x256xf32> to vector<12x240xf32>
    %89 = vector.extract_strided_slice %84 {offsets = [0, 0], sizes = [12, 16], strides = [1, 1]} : vector<12x256xf32> to vector<12x16xf32>
    %90 = tpu.concatenate %88, %89 in 1 : vector<12x240xf32>, vector<12x16xf32> -> vector<12x256xf32>
    %cst_11 = arith.constant 2.000000e+00 : f32
    %91 = vector.broadcast %cst_11 : f32 to vector<12x256xf32>
    %92 = arith.mulf %91, %84 : vector<12x256xf32>
    %93 = arith.addf %87, %92 : vector<12x256xf32>
    %94 = arith.addf %93, %90 : vector<12x256xf32>
    %95 = arith.subf %90, %87 : vector<12x256xf32>
    %96 = vector.extract_strided_slice %94 {offsets = [0, 15], sizes = [12, 241], strides = [1, 1]} : vector<12x256xf32> to vector<12x241xf32>
    %97 = vector.extract_strided_slice %94 {offsets = [0, 0], sizes = [12, 15], strides = [1, 1]} : vector<12x256xf32> to vector<12x15xf32>
    %98 = tpu.concatenate %96, %97 in 1 : vector<12x241xf32>, vector<12x15xf32> -> vector<12x256xf32>
    %99 = vector.extract_strided_slice %94 {offsets = [0, 255], sizes = [12, 1], strides = [1, 1]} : vector<12x256xf32> to vector<12x1xf32>
    %100 = vector.extract_strided_slice %94 {offsets = [0, 0], sizes = [12, 255], strides = [1, 1]} : vector<12x256xf32> to vector<12x255xf32>
    %101 = tpu.concatenate %99, %100 in 1 : vector<12x1xf32>, vector<12x255xf32> -> vector<12x256xf32>
    %102 = vector.shape_cast %18 : vector<1x256xi1> to vector<1x256xi1>
    %103 = vector.broadcast %102 : vector<1x256xi1> to vector<12x256xi1>
    %104 = arith.select %103, %98, %101 : vector<12x256xi1>, vector<12x256xf32>
    %105 = vector.extract_strided_slice %94 {offsets = [0, 241], sizes = [12, 15], strides = [1, 1]} : vector<12x256xf32> to vector<12x15xf32>
    %106 = vector.extract_strided_slice %94 {offsets = [0, 0], sizes = [12, 241], strides = [1, 1]} : vector<12x256xf32> to vector<12x241xf32>
    %107 = tpu.concatenate %105, %106 in 1 : vector<12x15xf32>, vector<12x241xf32> -> vector<12x256xf32>
    %108 = vector.extract_strided_slice %94 {offsets = [0, 1], sizes = [12, 255], strides = [1, 1]} : vector<12x256xf32> to vector<12x255xf32>
    %109 = vector.extract_strided_slice %94 {offsets = [0, 0], sizes = [12, 1], strides = [1, 1]} : vector<12x256xf32> to vector<12x1xf32>
    %110 = tpu.concatenate %108, %109 in 1 : vector<12x255xf32>, vector<12x1xf32> -> vector<12x256xf32>
    %111 = vector.shape_cast %20 : vector<1x256xi1> to vector<1x256xi1>
    %112 = vector.broadcast %111 : vector<1x256xi1> to vector<12x256xi1>
    %113 = arith.select %112, %107, %110 : vector<12x256xi1>, vector<12x256xf32>
    %114 = vector.extract_strided_slice %95 {offsets = [0, 15], sizes = [12, 241], strides = [1, 1]} : vector<12x256xf32> to vector<12x241xf32>
    %115 = vector.extract_strided_slice %95 {offsets = [0, 0], sizes = [12, 15], strides = [1, 1]} : vector<12x256xf32> to vector<12x15xf32>
    %116 = tpu.concatenate %114, %115 in 1 : vector<12x241xf32>, vector<12x15xf32> -> vector<12x256xf32>
    %117 = vector.extract_strided_slice %95 {offsets = [0, 255], sizes = [12, 1], strides = [1, 1]} : vector<12x256xf32> to vector<12x1xf32>
    %118 = vector.extract_strided_slice %95 {offsets = [0, 0], sizes = [12, 255], strides = [1, 1]} : vector<12x256xf32> to vector<12x255xf32>
    %119 = tpu.concatenate %117, %118 in 1 : vector<12x1xf32>, vector<12x255xf32> -> vector<12x256xf32>
    %120 = vector.shape_cast %18 : vector<1x256xi1> to vector<1x256xi1>
    %121 = vector.broadcast %120 : vector<1x256xi1> to vector<12x256xi1>
    %122 = arith.select %121, %116, %119 : vector<12x256xi1>, vector<12x256xf32>
    %123 = vector.extract_strided_slice %95 {offsets = [0, 241], sizes = [12, 15], strides = [1, 1]} : vector<12x256xf32> to vector<12x15xf32>
    %124 = vector.extract_strided_slice %95 {offsets = [0, 0], sizes = [12, 241], strides = [1, 1]} : vector<12x256xf32> to vector<12x241xf32>
    %125 = tpu.concatenate %123, %124 in 1 : vector<12x15xf32>, vector<12x241xf32> -> vector<12x256xf32>
    %126 = vector.extract_strided_slice %95 {offsets = [0, 1], sizes = [12, 255], strides = [1, 1]} : vector<12x256xf32> to vector<12x255xf32>
    %127 = vector.extract_strided_slice %95 {offsets = [0, 0], sizes = [12, 1], strides = [1, 1]} : vector<12x256xf32> to vector<12x1xf32>
    %128 = tpu.concatenate %126, %127 in 1 : vector<12x255xf32>, vector<12x1xf32> -> vector<12x256xf32>
    %129 = vector.shape_cast %20 : vector<1x256xi1> to vector<1x256xi1>
    %130 = vector.broadcast %129 : vector<1x256xi1> to vector<12x256xi1>
    %131 = arith.select %130, %125, %128 : vector<12x256xi1>, vector<12x256xf32>
    %132 = arith.subf %113, %104 : vector<12x256xf32>
    %cst_12 = arith.constant 2.000000e+00 : f32
    %133 = vector.broadcast %cst_12 : f32 to vector<12x256xf32>
    %134 = arith.mulf %133, %95 : vector<12x256xf32>
    %135 = arith.addf %122, %134 : vector<12x256xf32>
    %136 = arith.addf %135, %131 : vector<12x256xf32>
    %cst_13 = arith.constant 2.000000e+00 : f32
    %137 = vector.broadcast %cst_13 : f32 to vector<12x256xf32>
    %138 = arith.mulf %137, %94 : vector<12x256xf32>
    %139 = arith.addf %104, %138 : vector<12x256xf32>
    %140 = arith.addf %139, %113 : vector<12x256xf32>
    %cst_14 = arith.constant 1.600000e+01 : f32
    %141 = vector.broadcast %cst_14 : f32 to vector<12x256xf32>
    %142 = arith.mulf %141, %84 : vector<12x256xf32>
    %143 = arith.subf %140, %142 : vector<12x256xf32>
    %144 = tpu.concatenate %84, %132, %136, %143 in 0 : vector<12x256xf32>, vector<12x256xf32>, vector<12x256xf32>, vector<12x256xf32> -> vector<48x256xf32>
    %145 = tpu.concatenate %82, %144 in 1 : vector<48x256xf32>, vector<48x256xf32> -> vector<48x512xf32>
    %146 = arith.truncf %145 : vector<48x512xf32> to vector<48x512xbf16>
    %c0_15 = arith.constant 0 : index
    %c0_16 = arith.constant 0 : index
    %147 = vector.load %arg3[%c0_15, %c0_16] : memref<96x48xbf16, #tpu.memory_space<vmem>>, vector<96x48xbf16>
    %cst_17 = arith.constant dense<0.000000e+00> : vector<96x512xf32>
    %148 = tpu.matmul %147, %146, %cst_17 {dimension_numbers = #tpu.dot_dimension_numbers<[1], [0], [0], [1], [0, 0, 1, 1], [], []>} : vector<96x48xbf16>, vector<48x512xbf16>, vector<96x512xf32> -> vector<96x512xf32>
    %c0_18 = arith.constant 0 : index
    %c0_19 = arith.constant 0 : index
    %149 = vector.load %arg4[%c0_18, %c0_19] : memref<96x1xf32, #tpu.memory_space<vmem>>, vector<96x1xf32>
    %150 = vector.broadcast %149 : vector<96x1xf32> to vector<96x512xf32>
    %151 = arith.addf %148, %150 : vector<96x512xf32>
    %cst_20 = arith.constant 0.000000e+00 : f32
    %152 = vector.broadcast %cst_20 : f32 to vector<96x512xf32>
    %153 = arith.maximumf %151, %152 : vector<96x512xf32>
    %154 = arith.truncf %153 : vector<96x512xf32> to vector<96x512xbf16>
    %c0_21 = arith.constant 0 : index
    %c0_22 = arith.constant 0 : index
    %155 = vector.load %arg5[%c0_21, %c0_22] : memref<12x96xbf16, #tpu.memory_space<vmem>>, vector<12x96xbf16>
    %cst_23 = arith.constant dense<0.000000e+00> : vector<12x512xf32>
    %156 = tpu.matmul %155, %154, %cst_23 {dimension_numbers = #tpu.dot_dimension_numbers<[1], [0], [0], [1], [0, 0, 1, 1], [], []>} : vector<12x96xbf16>, vector<96x512xbf16>, vector<12x512xf32> -> vector<12x512xf32>
    %157 = vector.extract_strided_slice %156 {offsets = [0, 0], sizes = [12, 256], strides = [1, 1]} : vector<12x512xf32> to vector<12x256xf32>
    %c0_24 = arith.constant 0 : index
    %c0_25 = arith.constant 0 : index
    %c0_26 = arith.constant 0 : index
    %158 = vector.load %arg2[%c0_24, %c0_25, %c0_26] : memref<2x1x256xf32, #tpu.memory_space<vmem>>, vector<1x1x256xf32>
    %159 = vector.shape_cast %158 : vector<1x1x256xf32> to vector<1x256xf32>
    %160 = vector.broadcast %159 : vector<1x256xf32> to vector<12x256xf32>
    %161 = arith.mulf %157, %160 : vector<12x256xf32>
    %162 = arith.addf %22, %161 : vector<12x256xf32>
    %c0_27 = arith.constant 0 : index
    %c0_28 = arith.constant 0 : index
    %c0_29 = arith.constant 0 : index
    %163 = vector.load %arg6[%c0_27, %c0_28, %c0_29] : memref<2x12x256xf32, #tpu.memory_space<vmem>>, vector<1x12x256xf32>
    %164 = vector.shape_cast %163 : vector<1x12x256xf32> to vector<12x256xf32>
    %165 = vector.shape_cast %162 : vector<12x256xf32> to vector<1x12x256xf32>
    tpu.vector_store %arg6[%c0_27, %c0_28, %c0_29], %165 {strides = array<i32>} : memref<2x12x256xf32, #tpu.memory_space<vmem>>, vector<1x12x256xf32>,
    %166 = vector.extract_strided_slice %156 {offsets = [0, 256], sizes = [12, 256], strides = [1, 1]} : vector<12x512xf32> to vector<12x256xf32>
    %c1_30 = arith.constant 1 : index
    %c0_31 = arith.constant 0 : index
    %c0_32 = arith.constant 0 : index
    %167 = vector.load %arg2[%c1_30, %c0_31, %c0_32] : memref<2x1x256xf32, #tpu.memory_space<vmem>>, vector<1x1x256xf32>
    %168 = vector.shape_cast %167 : vector<1x1x256xf32> to vector<1x256xf32>
    %169 = vector.broadcast %168 : vector<1x256xf32> to vector<12x256xf32>
    %170 = arith.mulf %166, %169 : vector<12x256xf32>
    %171 = arith.addf %84, %170 : vector<12x256xf32>
    %c1_33 = arith.constant 1 : index
    %c0_34 = arith.constant 0 : index
    %c0_35 = arith.constant 0 : index
    %172 = vector.load %arg6[%c1_33, %c0_34, %c0_35] : memref<2x12x256xf32, #tpu.memory_space<vmem>>, vector<1x12x256xf32>
    %173 = vector.shape_cast %172 : vector<1x12x256xf32> to vector<12x256xf32>
    %174 = vector.shape_cast %171 : vector<12x256xf32> to vector<1x12x256xf32>
    tpu.vector_store %arg6[%c1_33, %c0_34, %c0_35], %174 {strides = array<i32>} : memref<2x12x256xf32, #tpu.memory_space<vmem>>, vector<1x12x256xf32>,
    return
  }
  func.func @transform_0(%arg0: i32) -> (i32, i32, i32) {
    %c0_i32 = arith.constant 0 : i32
    %c0_i32_0 = arith.constant 0 : i32
    %c0_i32_1 = arith.constant 0 : i32
    return %arg0, %c0_i32, %c0_i32_0 : i32, i32, i32
  }
  func.func @transform_1(%arg0: i32) -> (i32, i32, i32) {
    %c0_i32 = arith.constant 0 : i32
    %c0_i32_0 = arith.constant 0 : i32
    %c0_i32_1 = arith.constant 0 : i32
    return %arg0, %c0_i32, %c0_i32_0 : i32, i32, i32
  }
  func.func @transform_2(%arg0: i32) -> (i32, i32) {
    %c0_i32 = arith.constant 0 : i32
    %c0_i32_0 = arith.constant 0 : i32
    %c0_i32_1 = arith.constant 0 : i32
    return %c0_i32, %c0_i32_0 : i32, i32
  }
  func.func @transform_3(%arg0: i32) -> (i32, i32) {
    %c0_i32 = arith.constant 0 : i32
    %c0_i32_0 = arith.constant 0 : i32
    %c0_i32_1 = arith.constant 0 : i32
    return %c0_i32, %c0_i32_0 : i32, i32
  }
  func.func @transform_4(%arg0: i32) -> (i32, i32) {
    %c0_i32 = arith.constant 0 : i32
    %c0_i32_0 = arith.constant 0 : i32
    %c0_i32_1 = arith.constant 0 : i32
    return %c0_i32, %c0_i32_0 : i32, i32
  }
  func.func @transform_5(%arg0: i32) -> (i32, i32, i32) {
    %c0_i32 = arith.constant 0 : i32
    %c0_i32_0 = arith.constant 0 : i32
    %c0_i32_1 = arith.constant 0 : i32
    return %arg0, %c0_i32, %c0_i32_0 : i32, i32, i32
  }
}

</mosaic_0001>

<llo_original>
// kernel: tpu_custom_call.1
$region0: #{tpu_custom_call.1}
  #allocation0 [shape = 'u32[]', space=smem, size = 0x4, offset = 0x4, fixed_abs, tag = 'smem constant byte address 0x4 - core index']
  #allocation1 [shape = 'u32[144,128]{1,0:T(1,128)}', space=vmem, size = 0x12000, scoped, tag = 'internal scratch']
  %s0 = inlined_call_operand.vmem [shape: f32[4,12,256], index: 0, kind: input, shape index: {}]
  %s1 = inlined_call_operand.vmem [shape: f32[4,1,256], index: 1, kind: input, shape index: {}]
  %s2 = inlined_call_operand.vmem [shape: bf16[96,48], index: 2, kind: input, shape index: {}]
  %s3 = inlined_call_operand.vmem [shape: f32[96,1], index: 3, kind: input, shape index: {}]
  %s4 = inlined_call_operand.vmem [shape: bf16[12,96], index: 4, kind: input, shape index: {}]
  %s5 = inlined_call_operand.vmem [shape: f32[4,12,256], index: 5, kind: output, shape index: {}]
  %s6 = sld [smem:[#allocation0]]
  $region53: #{tpu_custom_call.1} parent=0
    _
  %s8 = ssub.s32 1, %s6
  %s9 = scalar_select 0, %s8, %s6
  loop: start=0, step=1, limit=4
  $region2: #{tpu_custom_call.1} parent=0 // loop_pre_header
    _
  $region3: #{tpu_custom_call.1} parent=0 // loop_header
    %s11 = sphi 0, %s15
    %p12 = scmp.ge.s32.totalorder %s11, 4
    %s21 = sphi 0, %s23
    %s24 = sphi 0, %s21
    %s25 = sphi 0, %s24
    %s41 = sphi 0, %s25
    %s47 = sphi 0, %s49
    %s50 = sphi 0, %s47
    %s51 = sphi 0, %s50
    %s67 = sphi 0, %s51
    %s71 = sphi 0, %s71
    %s73 = sphi 0, %s71
    %s74 = sphi 0, %s73
    %s88 = sphi 0, %s74
    %s92 = sphi 0, %s92
    %s94 = sphi 0, %s92
    %s95 = sphi 0, %s94
    %s109 = sphi 0, %s95
    %s113 = sphi 0, %s113
    %s115 = sphi 0, %s113
    %s116 = sphi 0, %s115
    %s130 = sphi 0, %s116
    %s136 = sphi 0, %s138
    %s139 = sphi 0, %s136
    %s140 = sphi 0, %s139
    %s156 = sphi 0, %s140
  $region4: #{tpu_custom_call.1} parent=0 // loop_header_branch
    %14 = sbr.rel (%p12) target = $region8
  $region5: #{tpu_custom_call.1} parent=0 // loop_body
    %s16 = ssub.s32 %s11, 1
    %s17 = ssub.s32 %s11, 2
    %s18 = sadd.s32 %s11, 1
    %s19 = ssub.s32 %s11, %s18
    %p20 = scmp.eq.s32.totalorder %s19, 0
    %s22 = sadd.s32 %s21, 1
    %s23 = scalar_select %p20, %s21, %s22
    %p26 = pneg %p20
    %p27 = scmp.eq.s32.totalorder %s11, 1
    %p28 = por %p26, %p27
    %p29 = scmp.ne.s32.totalorder %s21, %s24
    %p30 = scmp.eq.s32.totalorder %s11, 0
    %p31 = por %p29, %p30
    %p32 = scmp.ne.s32.totalorder %s21, %s24
    %p33 = scmp.eq.s32.totalorder %s16, 1
    %p34 = por %p32, %p33
    %p35 = scmp.ne.s32.totalorder %s24, %s25
    %p36 = scmp.eq.s32.totalorder %s16, 0
    %p37 = por %p35, %p36
    %p38 = scmp.ne.s32.totalorder %s24, %s25
    %p39 = scmp.eq.s32.totalorder %s17, 1
    %p40 = por %p38, %p39
    %p42 = scmp.ne.s32.totalorder %s25, %s41
    %p43 = scmp.eq.s32.totalorder %s17, 0
    %p44 = por %p42, %p43
    %s45 = ssub.s32 %s11, %s18
    %p46 = scmp.eq.s32.totalorder %s45, 0
    %s48 = sadd.s32 %s47, 1
    %s49 = scalar_select %p46, %s47, %s48
    %p52 = pneg %p46
    %p53 = scmp.eq.s32.totalorder %s11, 1
    %p54 = por %p52, %p53
    %p55 = scmp.ne.s32.totalorder %s47, %s50
    %p56 = scmp.eq.s32.totalorder %s11, 0
    %p57 = por %p55, %p56
    %p58 = scmp.ne.s32.totalorder %s47, %s50
    %p59 = scmp.eq.s32.totalorder %s16, 1
    %p60 = por %p58, %p59
    %p61 = scmp.ne.s32.totalorder %s50, %s51
    %p62 = scmp.eq.s32.totalorder %s16, 0
    %p63 = por %p61, %p62
    %p64 = scmp.ne.s32.totalorder %s50, %s51
    %p65 = scmp.eq.s32.totalorder %s17, 1
    %p66 = por %p64, %p65
    %p68 = scmp.ne.s32.totalorder %s51, %s67
    %p69 = scmp.eq.s32.totalorder %s17, 0
    %p70 = por %p68, %p69
    %s72 = sadd.s32 %s71, 1
    %p75 = scmp.eq.s32.totalorder %s11, 1
    %p76 = scmp.ne.s32.totalorder %s71, %s73
    %p77 = scmp.eq.s32.totalorder %s11, 0
    %p78 = por %p76, %p77
    %p79 = scmp.ne.s32.totalorder %s71, %s73
    %p80 = scmp.eq.s32.totalorder %s16, 1
    %p81 = por %p79, %p80
    %p82 = scmp.ne.s32.totalorder %s73, %s74
    %p83 = scmp.eq.s32.totalorder %s16, 0
    %p84 = por %p82, %p83
    %p85 = scmp.ne.s32.totalorder %s73, %s74
    %p86 = scmp.eq.s32.totalorder %s17, 1
    %p87 = por %p85, %p86
    %p89 = scmp.ne.s32.totalorder %s74, %s88
    %p90 = scmp.eq.s32.totalorder %s17, 0
    %p91 = por %p89, %p90
    %s93 = sadd.s32 %s92, 1
    %p96 = scmp.eq.s32.totalorder %s11, 1
    %p97 = scmp.ne.s32.totalorder %s92, %s94
    %p98 = scmp.eq.s32.totalorder %s11, 0
    %p99 = por %p97, %p98
    %p100 = scmp.ne.s32.totalorder %s92, %s94
    %p101 = scmp.eq.s32.totalorder %s16, 1
    %p102 = por %p100, %p101
    %p103 = scmp.ne.s32.totalorder %s94, %s95
    %p104 = scmp.eq.s32.totalorder %s16, 0
    %p105 = por %p103, %p104
    %p106 = scmp.ne.s32.totalorder %s94, %s95
    %p107 = scmp.eq.s32.totalorder %s17, 1
    %p108 = por %p106, %p107
    %p110 = scmp.ne.s32.totalorder %s95, %s109
    %p111 = scmp.eq.s32.totalorder %s17, 0
    %p112 = por %p110, %p111
    %s114 = sadd.s32 %s113, 1
    %p117 = scmp.eq.s32.totalorder %s11, 1
    %p118 = scmp.ne.s32.totalorder %s113, %s115
    %p119 = scmp.eq.s32.totalorder %s11, 0
    %p120 = por %p118, %p119
    %p121 = scmp.ne.s32.totalorder %s113, %s115
    %p122 = scmp.eq.s32.totalorder %s16, 1
    %p123 = por %p121, %p122
    %p124 = scmp.ne.s32.totalorder %s115, %s116
    %p125 = scmp.eq.s32.totalorder %s16, 0
    %p126 = por %p124, %p125
    %p127 = scmp.ne.s32.totalorder %s115, %s116
    %p128 = scmp.eq.s32.totalorder %s17, 1
    %p129 = por %p127, %p128
    %p131 = scmp.ne.s32.totalorder %s116, %s130
    %p132 = scmp.eq.s32.totalorder %s17, 0
    %p133 = por %p131, %p132
    %s134 = ssub.s32 %s11, %s18
    %p135 = scmp.eq.s32.totalorder %s134, 0
    %s137 = sadd.s32 %s136, 1
    %s138 = scalar_select %p135, %s136, %s137
    %p141 = pneg %p135
    %p142 = scmp.eq.s32.totalorder %s11, 1
    %p143 = por %p141, %p142
    %p144 = scmp.ne.s32.totalorder %s136, %s139
    %p145 = scmp.eq.s32.totalorder %s11, 0
    %p146 = por %p144, %p145
    %p147 = scmp.ne.s32.totalorder %s136, %s139
    %p148 = scmp.eq.s32.totalorder %s16, 1
    %p149 = por %p147, %p148
    %p150 = scmp.ne.s32.totalorder %s139, %s140
    %p151 = scmp.eq.s32.totalorder %s16, 0
    %p152 = por %p150, %p151
    %p153 = scmp.ne.s32.totalorder %s139, %s140
    %p154 = scmp.eq.s32.totalorder %s17, 1
    %p155 = por %p153, %p154
    %p157 = scmp.ne.s32.totalorder %s140, %s156
    %p158 = scmp.eq.s32.totalorder %s17, 0
    %p159 = por %p157, %p158
    %p160 = scmp.le.s32.totalorder 1, %s11
    %p161 = scmp.lt.s32.totalorder %s11, 3
    %p162 = pnand %p160, %p161
    %p163 = pneg %p162
    // Predicated region
    $region9: #{tpu_custom_call.1} parent=5 // pred_check
      _
    $region10: #{tpu_custom_call.1} parent=5 // pred_check_branch
      %165 = sbr.rel (%p162) target = $region12
    $region11: #{tpu_custom_call.1} parent=5 // pred_region
      %s166 = ssub.s32 %s11, 1
      // Predicated region
      $region13: #{tpu_custom_call.1} parent=11 // pred_check
        %p167 = pneg %p84
      $region14: #{tpu_custom_call.1} parent=11 // pred_check_branch
        %169 = sbr.rel (%p167) target = $region16
      $region15: #{tpu_custom_call.1} parent=11 // pred_region
        _
      $region16: #{tpu_custom_call.1} parent=11 // pred_fallthru
        _
      // Predicated region
      $region17: #{tpu_custom_call.1} parent=11 // pred_check
        %p170 = pneg %p105
      $region18: #{tpu_custom_call.1} parent=11 // pred_check_branch
        %172 = sbr.rel (%p170) target = $region20
      $region19: #{tpu_custom_call.1} parent=11 // pred_region
        _
      $region20: #{tpu_custom_call.1} parent=11 // pred_fallthru
        _
      // Predicated region
      $region21: #{tpu_custom_call.1} parent=11 // pred_check
        %p173 = pneg %p126
      $region22: #{tpu_custom_call.1} parent=11 // pred_check_branch
        %175 = sbr.rel (%p173) target = $region24
      $region23: #{tpu_custom_call.1} parent=11 // pred_region
        _
      $region24: #{tpu_custom_call.1} parent=11 // pred_fallthru
        _
    $region12: #{tpu_custom_call.1} parent=5 // pred_fallthru
      _
    %p176 = scmp.lt.s32.totalorder %s11, 2
    // Predicated region
    $region25: #{tpu_custom_call.1} parent=5 // pred_check
      %p177 = pneg %p176
    $region26: #{tpu_custom_call.1} parent=5 // pred_check_branch
      %179 = sbr.rel (%p177) target = $region28
    $region27: #{tpu_custom_call.1} parent=5 // pred_region
      // Predicated region
      $region29: #{tpu_custom_call.1} parent=27 // pred_check
        %p180 = pneg %p31
      $region30: #{tpu_custom_call.1} parent=27 // pred_check_branch
        %182 = sbr.rel (%p180) target = $region32
      $region31: #{tpu_custom_call.1} parent=27 // pred_region
        %s183 = smul.u32 2, %s11
        %p184 = scmp.lt.s32.totalorder %s183, 3
        %s185 = scalar_select %p184, %s183, 3
        %s186 = smul.addr %s185, 4
        %s187 = smul.addr %s186, 8
        %s188 = scalar_lea.vmem %s0, %s187
        %s189 = smul.u32 2, %s11
      $region32: #{tpu_custom_call.1} parent=27 // pred_fallthru
        _
      // Predicated region
      $region33: #{tpu_custom_call.1} parent=27 // pred_check
        %p190 = pneg %p57
      $region34: #{tpu_custom_call.1} parent=27 // pred_check_branch
        %192 = sbr.rel (%p190) target = $region36
      $region35: #{tpu_custom_call.1} parent=27 // pred_region
        %s193 = smul.u32 2, %s11
        %p194 = scmp.lt.s32.totalorder %s193, 3
        %s195 = scalar_select %p194, %s193, 3
        %s196 = smul.addr %s195, 2
        %s197 = scalar_lea.vmem %s1, %s196
        %s198 = smul.u32 2, %s11
      $region36: #{tpu_custom_call.1} parent=27 // pred_fallthru
        _
    $region28: #{tpu_custom_call.1} parent=5 // pred_fallthru
      _
    %p199 = scmp.le.s32.totalorder 1, %s11
    %p200 = scmp.lt.s32.totalorder %s11, 3
    %p201 = pnand %p199, %p200
    %p202 = pneg %p201
    // Predicated region
    $region37: #{tpu_custom_call.1} parent=5 // pred_check
      _
    $region38: #{tpu_custom_call.1} parent=5 // pred_check_branch
      %204 = sbr.rel (%p201) target = $region40
    $region39: #{tpu_custom_call.1} parent=5 // pred_region
      %s205 = ssub.s32 %s11, 1
      %s206 = smul.u32 2, %s16
      %p207 = scmp.lt.s32.totalorder %s206, 3
      %s208 = scalar_select %p207, %s206, 3
      %s209 = smul.addr %s208, 4
      %s210 = smul.addr %s209, 8
      %s211 = scalar_lea.vmem %s0, %s210
      %p212 = pneg %p37
      %p213 = pneg %p34
      %s214 = smul.u32 2, %s16
      %p215 = scmp.lt.s32.totalorder %s214, 3
      %s216 = scalar_select %p215, %s214, 3
      %s217 = smul.addr %s216, 2
      %s218 = scalar_lea.vmem %s1, %s217
      %p219 = pneg %p63
      %p220 = pneg %p60
      %p221 = pneg %p84
      %p222 = pneg %p81
      %p223 = pneg %p105
      %p224 = pneg %p102
      %p225 = pneg %p126
      %p226 = pneg %p123
      %p227 = pneg %p152
      %p228 = pneg %p149
      %s229 = smul.u32 2, %s16
      %p230 = scmp.lt.s32.totalorder %s229, 3
      %s231 = scalar_select %p230, %s229, 3
      %s232 = smul.addr %s231, 4
      %s233 = smul.addr %s232, 8
      %s234 = scalar_lea.vmem %s5, %s233
      %s235 = smul.u32 2, %s16
      %p236 = scmp.lt.s32.totalorder %s235, 3
      %s237 = scalar_select %p236, %s235, 3
      %s238 = smul.addr %s237, 4
      %s239 = smul.addr %s238, 8
      %s240 = scalar_lea.vmem %s0, %s239
      %s241 = smul.u32 2, %s16
      %s242 = smul.u32 2, %s16
      %p243 = scmp.lt.s32.totalorder %s242, 3
      %s244 = scalar_select %p243, %s242, 3
      %s245 = smul.addr %s244, 2
      %s246 = scalar_lea.vmem %s1, %s245
      %s247 = smul.u32 2, %s16
      %s248 = smul.u32 2, %s16
      %p249 = scmp.lt.s32.totalorder %s248, 3
      %s250 = scalar_select %p249, %s248, 3
      %s251 = smul.addr %s250, 4
      %s252 = smul.addr %s251, 8
      %s253 = scalar_lea.vmem %s5, %s252
      %s254 = smul.u32 2, %s16
      %v256 = vlaneseq
      %v257 = vand.u32 %v256, 127
      %v258 = vadd.s32 %v257, 128
      %vm259 = vcmp.lt.s32.totalorder %v257, 0
      %v260 = vsub.s32 0, %v257
      %v261 = vsel %vm259, %v260, %v257
      %v262 = vshrl.u32 %v261, 4
      %v263 = vand.u32 %v261, 15
      %v264 = vsub.s32 0, %v263
      %v265 = vsel %vm259, %v264, %v263
      %vm266 = vcmp.lt.s32.totalorder %v258, 0
      %v267 = vsub.s32 0, %v258
      %v268 = vsel %vm266, %v267, %v258
      %v269 = vshrl.u32 %v268, 4
      %v270 = vand.u32 %v268, 15
      %v271 = vsub.s32 0, %v270
      %v272 = vsel %vm266, %v271, %v270
      %vm273 = vcmp.ne.s32.totalorder %v265, 0
      %vm274 = vcmp.ne.s32.totalorder %v272, 0
      %vm275 = vcmp.lt.s32.totalorder %v265, 0
      %vm276 = vcmp.lt.s32.totalorder %v272, 0
      %vm277 = vmand %vm275, %vm273
      %vm278 = vmand %vm276, %vm274
      %v279 = vadd.s32 %v265, 16
      %v280 = vadd.s32 %v272, 16
      %v281 = vsel %vm277, %v279, %v265
      %v282 = vsel %vm278, %v280, %v272
      %vm283 = vcmp.eq.s32.totalorder %v281, 0
      %vm284 = vcmp.eq.s32.totalorder %v282, 0
      %vm285 = vcmp.eq.s32.totalorder %v281, 15
      %vm286 = vcmp.eq.s32.totalorder %v282, 15
      %v287 = vld [vmem:[%s240] sm:$0xff]
      %v288 = vld [vmem:[%s240 + $0x8] sm:$0xff]
      %v289 = vld [vmem:[%s240 + $0x10] sm:$0xf]
      %v290 = vld [vmem:[%s240 + $0x18] sm:$0xf]
      %293 = vrot.lane.b32.xlu0 %v288, 16
      %v294 = vpop.permute.xlu0 %293
      %295 = vrot.lane.b32.xlu0 %v290, 16
      %v296 = vpop.permute.xlu0 %295
      %301 = vrot.lane.b32.xlu0 %v287, 16
      %v302 = vpop.permute.xlu0 %301
      %303 = vrot.lane.b32.xlu0 %v289, 16
      %v304 = vpop.permute.xlu0 %303
      %vm305 = vcmask 130048
      %v306 = vsel %vm305, %v302, %v294
      %v307 = vsel %vm305, %v304, %v296
      %v312 = vsel %vm305, %v294, %v302
      %v313 = vsel %vm305, %v296, %v304
      %314 = vrot.lane.b32.xlu0 %v287, 112
      %v315 = vpop.permute.xlu0 %314
      %316 = vrot.lane.b32.xlu0 %v288, 112
      %v317 = vpop.permute.xlu0 %316
      %318 = vrot.lane.b32.xlu0 %v289, 112
      %v319 = vpop.permute.xlu0 %318
      %320 = vrot.lane.b32.xlu0 %v290, 112
      %v321 = vpop.permute.xlu0 %320
      %vm322 = vcmask 916480
      %v323 = vsel %vm322, %v315, %v317
      %v324 = vsel %vm322, %v319, %v321
      %v331 = vsel %vm322, %v317, %v315
      %v332 = vsel %vm322, %v321, %v319
      %v333 = vmul.f32 %v287, 2.0
      %v334 = vmul.f32 %v288, 2.0
      %v335 = vmul.f32 %v289, 2.0
      %v336 = vmul.f32 %v290, 2.0
      %v337 = vadd.f32 %v312, %v333
      %v338 = vadd.f32 %v306, %v334
      %v339 = vadd.f32 %v313, %v335
      %v340 = vadd.f32 %v307, %v336
      %v341 = vadd.f32 %v337, %v323
      %v342 = vadd.f32 %v338, %v331
      %v343 = vadd.f32 %v339, %v324
      %v344 = vadd.f32 %v340, %v332
      %v345 = vsub.f32 %v323, %v312
      %v346 = vsub.f32 %v331, %v306
      %v347 = vsub.f32 %v324, %v313
      %v348 = vsub.f32 %v332, %v307
      %353 = vrot.lane.b32.xlu0 %v341, 113
      %v354 = vpop.permute.xlu0 %353
      %355 = vrot.lane.b32.xlu0 %v342, 113
      %v356 = vpop.permute.xlu0 %355
      %357 = vrot.lane.b32.xlu0 %v343, 113
      %v358 = vpop.permute.xlu0 %357
      %359 = vrot.lane.b32.xlu0 %v344, 113
      %v360 = vpop.permute.xlu0 %359
      %vm361 = vcmask 924672
      %v362 = vsel %vm361, %v354, %v356
      %v363 = vsel %vm361, %v358, %v360
      %v370 = vsel %vm361, %v356, %v354
      %v371 = vsel %vm361, %v360, %v358
      %372 = vrot.lane.b32.xlu0 %v342, 1
      %v373 = vpop.permute.xlu0 %372
      %374 = vrot.lane.b32.xlu0 %v344, 1
      %v375 = vpop.permute.xlu0 %374
      %378 = vrot.lane.b32.xlu0 %v341, 1
      %v379 = vpop.permute.xlu0 %378
      %380 = vrot.lane.b32.xlu0 %v343, 1
      %v381 = vpop.permute.xlu0 %380
      %vm382 = vcmask 7168
      %v383 = vsel %vm382, %v379, %v373
      %v384 = vsel %vm382, %v381, %v375
      %v389 = vsel %vm382, %v373, %v379
      %v390 = vsel %vm382, %v375, %v381
      %v391 = vsel %vm283, 1, 0
      %v392 = vsel %vm284, 1, 0
      %vm393 = vcmp.eq.s32.totalorder %v391, 1
      %vm394 = vcmp.eq.s32.totalorder %v392, 1
      %v395 = vsel %vm393, %v362, %v389
      %v396 = vsel %vm394, %v370, %v383
      %v397 = vsel %vm393, %v363, %v390
      %v398 = vsel %vm394, %v371, %v384
      %399 = vrot.lane.b32.xlu0 %v342, 15
      %v400 = vpop.permute.xlu0 %399
      %401 = vrot.lane.b32.xlu0 %v344, 15
      %v402 = vpop.permute.xlu0 %401
      %405 = vrot.lane.b32.xlu0 %v341, 15
      %v406 = vpop.permute.xlu0 %405
      %407 = vrot.lane.b32.xlu0 %v343, 15
      %v408 = vpop.permute.xlu0 %407
      %vm409 = vcmask 121856
      %v410 = vsel %vm409, %v406, %v400
      %v411 = vsel %vm409, %v408, %v402
      %v416 = vsel %vm409, %v400, %v406
      %v417 = vsel %vm409, %v402, %v408
      %418 = vrot.lane.b32.xlu0 %v341, 127
      %v419 = vpop.permute.xlu0 %418
      %420 = vrot.lane.b32.xlu0 %v342, 127
      %v421 = vpop.permute.xlu0 %420
      %422 = vrot.lane.b32.xlu0 %v343, 127
      %v423 = vpop.permute.xlu0 %422
      %424 = vrot.lane.b32.xlu0 %v344, 127
      %v425 = vpop.permute.xlu0 %424
      %vm426 = vcmask 1039360
      %v427 = vsel %vm426, %v419, %v421
      %v428 = vsel %vm426, %v423, %v425
      %v435 = vsel %vm426, %v421, %v419
      %v436 = vsel %vm426, %v425, %v423
      %v437 = vsel %vm285, 1, 0
      %v438 = vsel %vm286, 1, 0
      %vm439 = vcmp.eq.s32.totalorder %v437, 1
      %vm440 = vcmp.eq.s32.totalorder %v438, 1
      %v441 = vsel %vm439, %v416, %v427
      %v442 = vsel %vm440, %v410, %v435
      %v443 = vsel %vm439, %v417, %v428
      %v444 = vsel %vm440, %v411, %v436
      %449 = vrot.lane.b32.xlu0 %v345, 113
      %v450 = vpop.permute.xlu0 %449
      %451 = vrot.lane.b32.xlu0 %v346, 113
      %v452 = vpop.permute.xlu0 %451
      %453 = vrot.lane.b32.xlu0 %v347, 113
      %v454 = vpop.permute.xlu0 %453
      %455 = vrot.lane.b32.xlu0 %v348, 113
      %v456 = vpop.permute.xlu0 %455
      %v457 = vsel %vm361, %v450, %v452
      %v458 = vsel %vm361, %v454, %v456
      %v465 = vsel %vm361, %v452, %v450
      %v466 = vsel %vm361, %v456, %v454
      %467 = vrot.lane.b32.xlu0 %v346, 1
      %v468 = vpop.permute.xlu0 %467
      %469 = vrot.lane.b32.xlu0 %v348, 1
      %v470 = vpop.permute.xlu0 %469
      %473 = vrot.lane.b32.xlu0 %v345, 1
      %v474 = vpop.permute.xlu0 %473
      %475 = vrot.lane.b32.xlu0 %v347, 1
      %v476 = vpop.permute.xlu0 %475
      %v477 = vsel %vm382, %v474, %v468
      %v478 = vsel %vm382, %v476, %v470
      %v483 = vsel %vm382, %v468, %v474
      %v484 = vsel %vm382, %v470, %v476
      %v485 = vsel %vm393, %v457, %v483
      %v486 = vsel %vm394, %v465, %v477
      %v487 = vsel %vm393, %v458, %v484
      %v488 = vsel %vm394, %v466, %v478
      %489 = vrot.lane.b32.xlu0 %v346, 15
      %v490 = vpop.permute.xlu0 %489
      %491 = vrot.lane.b32.xlu0 %v348, 15
      %v492 = vpop.permute.xlu0 %491
      %495 = vrot.lane.b32.xlu0 %v345, 15
      %v496 = vpop.permute.xlu0 %495
      %497 = vrot.lane.b32.xlu0 %v347, 15
      %v498 = vpop.permute.xlu0 %497
      %v499 = vsel %vm409, %v496, %v490
      %v500 = vsel %vm409, %v498, %v492
      %v505 = vsel %vm409, %v490, %v496
      %v506 = vsel %vm409, %v492, %v498
      %507 = vrot.lane.b32.xlu0 %v345, 127
      %v508 = vpop.permute.xlu0 %507
      %509 = vrot.lane.b32.xlu0 %v346, 127
      %v510 = vpop.permute.xlu0 %509
      %511 = vrot.lane.b32.xlu0 %v347, 127
      %v512 = vpop.permute.xlu0 %511
      %513 = vrot.lane.b32.xlu0 %v348, 127
      %v514 = vpop.permute.xlu0 %513
      %v515 = vsel %vm426, %v508, %v510
      %v516 = vsel %vm426, %v512, %v514
      %v523 = vsel %vm426, %v510, %v508
      %v524 = vsel %vm426, %v514, %v512
      %v525 = vsel %vm439, %v505, %v515
      %v526 = vsel %vm440, %v499, %v523
      %v527 = vsel %vm439, %v506, %v516
      %v528 = vsel %vm440, %v500, %v524
      %v529 = vsub.f32 %v441, %v395
      %v530 = vsub.f32 %v442, %v396
      %v531 = vsub.f32 %v443, %v397
      %v532 = vsub.f32 %v444, %v398
      %v533 = vmul.f32 %v345, 2.0
      %v534 = vmul.f32 %v346, 2.0
      %v535 = vmul.f32 %v347, 2.0
      %v536 = vmul.f32 %v348, 2.0
      %v537 = vadd.f32 %v485, %v533
      %v538 = vadd.f32 %v486, %v534
      %v539 = vadd.f32 %v487, %v535
      %v540 = vadd.f32 %v488, %v536
      %v541 = vadd.f32 %v537, %v525
      %v542 = vadd.f32 %v538, %v526
      %v543 = vadd.f32 %v539, %v527
      %v544 = vadd.f32 %v540, %v528
      %v545 = vmul.f32 %v341, 2.0
      %v546 = vmul.f32 %v342, 2.0
      %v547 = vmul.f32 %v343, 2.0
      %v548 = vmul.f32 %v344, 2.0
      %v549 = vadd.f32 %v395, %v545
      %v550 = vadd.f32 %v396, %v546
      %v551 = vadd.f32 %v397, %v547
      %v552 = vadd.f32 %v398, %v548
      %v553 = vadd.f32 %v549, %v441
      %v554 = vadd.f32 %v550, %v442
      %v555 = vadd.f32 %v551, %v443
      %v556 = vadd.f32 %v552, %v444
      %v557 = vmul.f32 %v287, 16.0
      %v558 = vmul.f32 %v288, 16.0
      %v559 = vmul.f32 %v289, 16.0
      %v560 = vmul.f32 %v290, 16.0
      %v561 = vsub.f32 %v553, %v557
      %v562 = vsub.f32 %v554, %v558
      %v563 = vsub.f32 %v555, %v559
      %v564 = vsub.f32 %v556, %v560
      %vm569 = vcmask 1043456
      %v570 = vrot.slane %v529, 4
      %v571 = vrot.slane %v530, 4
      %v572 = vrot.slane %v531, 4
      %v573 = vsel %vm569, %v570, %v572
      %v574 = vrot.slane %v532, 4
      %v575 = vsel %vm569, %v571, %v574
      %v584 = vrot.slane %v561, 4
      %v585 = vrot.slane %v562, 4
      %v586 = vrot.slane %v563, 4
      %v587 = vsel %vm569, %v584, %v586
      %v588 = vrot.slane %v564, 4
      %v589 = vsel %vm569, %v585, %v588
      %v594 = vsel %vm569, %v289, %v570
      %v595 = vsel %vm569, %v290, %v571
      %v596 = vsel %vm569, %v543, %v584
      %v597 = vsel %vm569, %v544, %v585
      %s598 = scalar_lea.vmem %s240, 32
      %v599 = vld [vmem:[%s598] sm:$0xff]
      %v600 = vld [vmem:[%s598 + $0x8] sm:$0xff]
      %v601 = vld [vmem:[%s598 + $0x10] sm:$0xf]
      %v602 = vld [vmem:[%s598 + $0x18] sm:$0xf]
      %605 = vrot.lane.b32.xlu0 %v600, 16
      %v606 = vpop.permute.xlu0 %605
      %607 = vrot.lane.b32.xlu0 %v602, 16
      %v608 = vpop.permute.xlu0 %607
      %613 = vrot.lane.b32.xlu0 %v599, 16
      %v614 = vpop.permute.xlu0 %613
      %615 = vrot.lane.b32.xlu0 %v601, 16
      %v616 = vpop.permute.xlu0 %615
      %v617 = vsel %vm305, %v614, %v606
      %v618 = vsel %vm305, %v616, %v608
      %v623 = vsel %vm305, %v606, %v614
      %v624 = vsel %vm305, %v608, %v616
      %625 = vrot.lane.b32.xlu0 %v599, 112
      %v626 = vpop.permute.xlu0 %625
      %627 = vrot.lane.b32.xlu0 %v600, 112
      %v628 = vpop.permute.xlu0 %627
      %629 = vrot.lane.b32.xlu0 %v601, 112
      %v630 = vpop.permute.xlu0 %629
      %631 = vrot.lane.b32.xlu0 %v602, 112
      %v632 = vpop.permute.xlu0 %631
      %v633 = vsel %vm322, %v626, %v628
      %v634 = vsel %vm322, %v630, %v632
      %v641 = vsel %vm322, %v628, %v626
      %v642 = vsel %vm322, %v632, %v630
      %v643 = vmul.f32 %v599, 2.0
      %v644 = vmul.f32 %v600, 2.0
      %v645 = vmul.f32 %v601, 2.0
      %v646 = vmul.f32 %v602, 2.0
      %v647 = vadd.f32 %v623, %v643
      %v648 = vadd.f32 %v617, %v644
      %v649 = vadd.f32 %v624, %v645
      %v650 = vadd.f32 %v618, %v646
      %v651 = vadd.f32 %v647, %v633
      %v652 = vadd.f32 %v648, %v641
      %v653 = vadd.f32 %v649, %v634
      %v654 = vadd.f32 %v650, %v642
      %v655 = vsub.f32 %v633, %v623
      %v656 = vsub.f32 %v641, %v617
      %v657 = vsub.f32 %v634, %v624
      %v658 = vsub.f32 %v642, %v618
      %663 = vrot.lane.b32.xlu0 %v651, 113
      %v664 = vpop.permute.xlu0 %663
      %665 = vrot.lane.b32.xlu0 %v652, 113
      %v666 = vpop.permute.xlu0 %665
      %667 = vrot.lane.b32.xlu0 %v653, 113
      %v668 = vpop.permute.xlu0 %667
      %669 = vrot.lane.b32.xlu0 %v654, 113
      %v670 = vpop.permute.xlu0 %669
      %v671 = vsel %vm361, %v664, %v666
      %v672 = vsel %vm361, %v668, %v670
      %v679 = vsel %vm361, %v666, %v664
      %v680 = vsel %vm361, %v670, %v668
      %681 = vrot.lane.b32.xlu0 %v652, 1
      %v682 = vpop.permute.xlu0 %681
      %683 = vrot.lane.b32.xlu0 %v654, 1
      %v684 = vpop.permute.xlu0 %683
      %687 = vrot.lane.b32.xlu0 %v651, 1
      %v688 = vpop.permute.xlu0 %687
      %689 = vrot.lane.b32.xlu0 %v653, 1
      %v690 = vpop.permute.xlu0 %689
      %v691 = vsel %vm382, %v688, %v682
      %v692 = vsel %vm382, %v690, %v684
      %v697 = vsel %vm382, %v682, %v688
      %v698 = vsel %vm382, %v684, %v690
      %v699 = vsel %vm393, %v671, %v697
      %v700 = vsel %vm394, %v679, %v691
      %v701 = vsel %vm393, %v672, %v698
      %v702 = vsel %vm394, %v680, %v692
      %703 = vrot.lane.b32.xlu0 %v652, 15
      %v704 = vpop.permute.xlu0 %703
      %705 = vrot.lane.b32.xlu0 %v654, 15
      %v706 = vpop.permute.xlu0 %705
      %709 = vrot.lane.b32.xlu0 %v651, 15
      %v710 = vpop.permute.xlu0 %709
      %711 = vrot.lane.b32.xlu0 %v653, 15
      %v712 = vpop.permute.xlu0 %711
      %v713 = vsel %vm409, %v710, %v704
      %v714 = vsel %vm409, %v712, %v706
      %v719 = vsel %vm409, %v704, %v710
      %v720 = vsel %vm409, %v706, %v712
      %721 = vrot.lane.b32.xlu0 %v651, 127
      %v722 = vpop.permute.xlu0 %721
      %723 = vrot.lane.b32.xlu0 %v652, 127
      %v724 = vpop.permute.xlu0 %723
      %725 = vrot.lane.b32.xlu0 %v653, 127
      %v726 = vpop.permute.xlu0 %725
      %727 = vrot.lane.b32.xlu0 %v654, 127
      %v728 = vpop.permute.xlu0 %727
      %v729 = vsel %vm426, %v722, %v724
      %v730 = vsel %vm426, %v726, %v728
      %v737 = vsel %vm426, %v724, %v722
      %v738 = vsel %vm426, %v728, %v726
      %v739 = vsel %vm439, %v719, %v729
      %v740 = vsel %vm440, %v713, %v737
      %v741 = vsel %vm439, %v720, %v730
      %v742 = vsel %vm440, %v714, %v738
      %747 = vrot.lane.b32.xlu0 %v655, 113
      %v748 = vpop.permute.xlu0 %747
      %749 = vrot.lane.b32.xlu0 %v656, 113
      %v750 = vpop.permute.xlu0 %749
      %751 = vrot.lane.b32.xlu0 %v657, 113
      %v752 = vpop.permute.xlu0 %751
      %753 = vrot.lane.b32.xlu0 %v658, 113
      %v754 = vpop.permute.xlu0 %753
      %v755 = vsel %vm361, %v748, %v750
      %v756 = vsel %vm361, %v752, %v754
      %v763 = vsel %vm361, %v750, %v748
      %v764 = vsel %vm361, %v754, %v752
      %765 = vrot.lane.b32.xlu0 %v656, 1
      %v766 = vpop.permute.xlu0 %765
      %767 = vrot.lane.b32.xlu0 %v658, 1
      %v768 = vpop.permute.xlu0 %767
      %771 = vrot.lane.b32.xlu0 %v655, 1
      %v772 = vpop.permute.xlu0 %771
      %773 = vrot.lane.b32.xlu0 %v657, 1
      %v774 = vpop.permute.xlu0 %773
      %v775 = vsel %vm382, %v772, %v766
      %v776 = vsel %vm382, %v774, %v768
      %v781 = vsel %vm382, %v766, %v772
      %v782 = vsel %vm382, %v768, %v774
      %v783 = vsel %vm393, %v755, %v781
      %v784 = vsel %vm394, %v763, %v775
      %v785 = vsel %vm393, %v756, %v782
      %v786 = vsel %vm394, %v764, %v776
      %787 = vrot.lane.b32.xlu0 %v656, 15
      %v788 = vpop.permute.xlu0 %787
      %789 = vrot.lane.b32.xlu0 %v658, 15
      %v790 = vpop.permute.xlu0 %789
      %793 = vrot.lane.b32.xlu0 %v655, 15
      %v794 = vpop.permute.xlu0 %793
      %795 = vrot.lane.b32.xlu0 %v657, 15
      %v796 = vpop.permute.xlu0 %795
      %v797 = vsel %vm409, %v794, %v788
      %v798 = vsel %vm409, %v796, %v790
      %v803 = vsel %vm409, %v788, %v794
      %v804 = vsel %vm409, %v790, %v796
      %805 = vrot.lane.b32.xlu0 %v655, 127
      %v806 = vpop.permute.xlu0 %805
      %807 = vrot.lane.b32.xlu0 %v656, 127
      %v808 = vpop.permute.xlu0 %807
      %809 = vrot.lane.b32.xlu0 %v657, 127
      %v810 = vpop.permute.xlu0 %809
      %811 = vrot.lane.b32.xlu0 %v658, 127
      %v812 = vpop.permute.xlu0 %811
      %v813 = vsel %vm426, %v806, %v808
      %v814 = vsel %vm426, %v810, %v812
      %v821 = vsel %vm426, %v808, %v806
      %v822 = vsel %vm426, %v812, %v810
      %v823 = vsel %vm439, %v803, %v813
      %v824 = vsel %vm440, %v797, %v821
      %v825 = vsel %vm439, %v804, %v814
      %v826 = vsel %vm440, %v798, %v822
      %v827 = vsub.f32 %v739, %v699
      %v828 = vsub.f32 %v740, %v700
      %v829 = vsub.f32 %v741, %v701
      %v830 = vsub.f32 %v742, %v702
      %v831 = vmul.f32 %v655, 2.0
      %v832 = vmul.f32 %v656, 2.0
      %v833 = vmul.f32 %v657, 2.0
      %v834 = vmul.f32 %v658, 2.0
      %v835 = vadd.f32 %v783, %v831
      %v836 = vadd.f32 %v784, %v832
      %v837 = vadd.f32 %v785, %v833
      %v838 = vadd.f32 %v786, %v834
      %v839 = vadd.f32 %v835, %v823
      %v840 = vadd.f32 %v836, %v824
      %v841 = vadd.f32 %v837, %v825
      %v842 = vadd.f32 %v838, %v826
      %v843 = vmul.f32 %v651, 2.0
      %v844 = vmul.f32 %v652, 2.0
      %v845 = vmul.f32 %v653, 2.0
      %v846 = vmul.f32 %v654, 2.0
      %v847 = vadd.f32 %v699, %v843
      %v848 = vadd.f32 %v700, %v844
      %v849 = vadd.f32 %v701, %v845
      %v850 = vadd.f32 %v702, %v846
      %v851 = vadd.f32 %v847, %v739
      %v852 = vadd.f32 %v848, %v740
      %v853 = vadd.f32 %v849, %v741
      %v854 = vadd.f32 %v850, %v742
      %v855 = vmul.f32 %v599, 16.0
      %v856 = vmul.f32 %v600, 16.0
      %v857 = vmul.f32 %v601, 16.0
      %v858 = vmul.f32 %v602, 16.0
      %v859 = vsub.f32 %v851, %v855
      %v860 = vsub.f32 %v852, %v856
      %v861 = vsub.f32 %v853, %v857
      %v862 = vsub.f32 %v854, %v858
      %v867 = vrot.slane %v827, 4
      %v868 = vrot.slane %v828, 4
      %v869 = vrot.slane %v829, 4
      %v870 = vsel %vm569, %v867, %v869
      %v871 = vrot.slane %v830, 4
      %v872 = vsel %vm569, %v868, %v871
      %v881 = vrot.slane %v859, 4
      %v882 = vrot.slane %v860, 4
      %v883 = vrot.slane %v861, 4
      %v884 = vsel %vm569, %v881, %v883
      %v885 = vrot.slane %v862, 4
      %v886 = vsel %vm569, %v882, %v885
      %v891 = vsel %vm569, %v601, %v867
      %v892 = vsel %vm569, %v602, %v868
      %v893 = vsel %vm569, %v841, %v881
      %v894 = vsel %vm569, %v842, %v882
      %v895 = vpack.c.bf16 %v594, %v287
      %v896 = vpack.c.bf16 %v595, %v288
      %v897 = vpack.c.bf16 %v891, %v599
      %v898 = vpack.c.bf16 %v892, %v600
      %v899 = vpack.c.bf16 %v541, %v573
      %v900 = vpack.c.bf16 %v542, %v575
      %v901 = vpack.c.bf16 %v839, %v870
      %v902 = vpack.c.bf16 %v840, %v872
      %v903 = vpack.c.bf16 %v587, %v596
      %v904 = vpack.c.bf16 %v589, %v597
      %v905 = vpack.c.bf16 %v884, %v893
      %v906 = vpack.c.bf16 %v886, %v894
      %v907 = vld [vmem:[%s2] sm:$0xf]
      %v908 = vld [vmem:[%s2 + $0x4] sm:$0xf]
      %v909 = vld [vmem:[%s2 + $0x8] sm:$0xf]
      %v910 = vld [vmem:[%s2 + $0xc] sm:$0xf]
      %v911 = vld [vmem:[%s2 + $0x10] sm:$0xf]
      %v912 = vld [vmem:[%s2 + $0x14] sm:$0xf]
      %v913 = vld [vmem:[%s2 + $0x18] sm:$0xf]
      %v914 = vld [vmem:[%s2 + $0x1c] sm:$0xf]
      %v915 = vld [vmem:[%s2 + $0x20] sm:$0xf]
      %v916 = vld [vmem:[%s2 + $0x24] sm:$0xf]
      %v917 = vld [vmem:[%s2 + $0x28] sm:$0xf]
      %v918 = vld [vmem:[%s2 + $0x2c] sm:$0xf]
      %v919 = vld [vmem:[%s3] sm:$0xff]
      %v920 = vld [vmem:[%s3 + $0x8] sm:$0xff]
      %v921 = vld [vmem:[%s3 + $0x10] sm:$0xff]
      %v922 = vld [vmem:[%s3 + $0x18] sm:$0xff]
      %v923 = vld [vmem:[%s3 + $0x20] sm:$0xff]
      %v924 = vld [vmem:[%s3 + $0x28] sm:$0xff]
      %v925 = vld [vmem:[%s3 + $0x30] sm:$0xff]
      %v926 = vld [vmem:[%s3 + $0x38] sm:$0xff]
      %v927 = vld [vmem:[%s3 + $0x40] sm:$0xff]
      %v928 = vld [vmem:[%s3 + $0x48] sm:$0xff]
      %v929 = vld [vmem:[%s3 + $0x50] sm:$0xff]
      %v930 = vld [vmem:[%s3 + $0x58] sm:$0xff]
      %932 = vset.pattern.permute.xlu0 0
      %933 = vperm.xlu0 %932, %v919
      %v934 = vpop.permute.xlu0 %933
      %937 = vset.pattern.permute.xlu0 0
      %938 = vperm.xlu0 %937, %v920
      %v939 = vpop.permute.xlu0 %938
      %942 = vset.pattern.permute.xlu0 0
      %943 = vperm.xlu0 %942, %v921
      %v944 = vpop.permute.xlu0 %943
      %947 = vset.pattern.permute.xlu0 0
      %948 = vperm.xlu0 %947, %v922
      %v949 = vpop.permute.xlu0 %948
      %952 = vset.pattern.permute.xlu0 0
      %953 = vperm.xlu0 %952, %v923
      %v954 = vpop.permute.xlu0 %953
      %957 = vset.pattern.permute.xlu0 0
      %958 = vperm.xlu0 %957, %v924
      %v959 = vpop.permute.xlu0 %958
      %962 = vset.pattern.permute.xlu0 0
      %963 = vperm.xlu0 %962, %v925
      %v964 = vpop.permute.xlu0 %963
      %967 = vset.pattern.permute.xlu0 0
      %968 = vperm.xlu0 %967, %v926
      %v969 = vpop.permute.xlu0 %968
      %972 = vset.pattern.permute.xlu0 0
      %973 = vperm.xlu0 %972, %v927
      %v974 = vpop.permute.xlu0 %973
      %977 = vset.pattern.permute.xlu0 0
      %978 = vperm.xlu0 %977, %v928
      %v979 = vpop.permute.xlu0 %978
      %982 = vset.pattern.permute.xlu0 0
      %983 = vperm.xlu0 %982, %v929
      %v984 = vpop.permute.xlu0 %983
      %987 = vset.pattern.permute.xlu0 0
      %988 = vperm.xlu0 %987, %v930
      %v989 = vpop.permute.xlu0 %988
      %v1003 = vunpack.c.l.b16 %v907
      %v1004 = vunpack.c.l.b16 %v908
      %v1005 = vunpack.c.l.b16 %v909
      %v1006 = vunpack.c.l.b16 %v910
      %v1007 = vunpack.c.l.b16 %v911
      %v1008 = vunpack.c.l.b16 %v912
      %v1009 = vunpack.c.l.b16 %v913
      %v1010 = vunpack.c.l.b16 %v914
      %v1011 = vunpack.c.l.b16 %v915
      %v1012 = vunpack.c.l.b16 %v916
      %v1013 = vunpack.c.l.b16 %v917
      %v1014 = vunpack.c.l.b16 %v918
      %v1015 = vpack.c.b16 %v1004, %v1003
      %v1016 = vpack.c.b16 %v1006, %v1005
      %v1017 = vpack.c.b16 %v1008, %v1007
      %v1018 = vpack.c.b16 %v1010, %v1009
      %v1019 = vpack.c.b16 %v1012, %v1011
      %v1020 = vpack.c.b16 %v1014, %v1013
      %vm1021 = vcmask 392192
      %v1023 = vsel %vm1021, %v1015, 0
      %v1026 = vsel %vm1021, %v1016, 0
      %v1029 = vsel %vm1021, %v1017, 0
      %v1032 = vsel %vm1021, %v1018, 0
      %v1035 = vsel %vm1021, %v1019, 0
      %v1038 = vsel %vm1021, %v1020, 0
      %1040 = vmatprep.subr.bf16.mxu0 %v896
      %1041 = vmatpush1.bf16.msra.mxu0 %v895
      %1042 = vmatprep.subr.bf16.mxu0 %v900
      %1043 = vmatpush1.bf16.msra.mxu0 %v899
      %1044 = vmatprep.subr.bf16.mxu0 %v904
      %1045 = vmatpush1.bf16.msra.mxu0 %v903
      %1046 = vmatprep.subr.bf16.mxu0 0
      %1047 = vmatpush1.bf16.msra.mxu0 0
      %1048 = vmatprep.subr.bf16.mxu0 0
      %1049 = vmatpush1.bf16.msra.mxu0 0
      %1050 = vmatprep.subr.bf16.mxu0 0
      %1051 = vmatpush1.bf16.msra.mxu0 0
      %1052 = vmatprep.subr.bf16.mxu0 0
      %1053 = vmatpush1.bf16.msra.mxu0 0
      %1054 = vmatprep.subr.bf16.mxu0 0
      %1055 = vmatpush1.bf16.msra.mxu0 0
      %1056 = vmatprep.subr.bf16.mxu0 0
      %1057 = vmatpush1.bf16.msra.mxu0 0
      %1058 = vmatprep.subr.bf16.mxu0 0
      %1059 = vmatpush1.bf16.msra.mxu0 0
      %1060 = vmatprep.subr.bf16.mxu0 0
      %1061 = vmatpush1.bf16.msra.mxu0 0
      %1062 = vmatprep.subr.bf16.mxu0 0
      %1063 = vmatpush1.bf16.msra.mxu0 0
      %1064 = vmatprep.subr.bf16.mxu0 0
      %1065 = vmatpush1.bf16.msra.mxu0 0
      %1066 = vmatprep.subr.bf16.mxu0 0
      %1067 = vmatpush1.bf16.msra.mxu0 0
      %1068 = vmatprep.subr.bf16.mxu0 0
      %1069 = vmatpush1.bf16.msra.mxu0 0
      %1070 = vmatprep.subr.bf16.mxu0 0
      %1071 = vmatpush1.bf16.msra.mxu0 0
      %1072 = vmatprep.mubr.bf16.mxu0 0
      %1073 = vmatmul.mubr.bf16.gmra.mrb[0].mxu0 %v1023
      %v1074 = vpop.f32.mrb[0].mxu0
      %v1075 = vadd.f32 %v934, %v1074
      %v1076 = vpop.f32.mrb[0].mxu0
      %v1077 = vadd.f32 %v934, %v1076
      %v1078 = vpop.f32.mrb[0].mxu0
      %v1079 = vadd.f32 %v939, %v1078
      %v1080 = vpop.f32.mrb[0].mxu0
      %v1081 = vadd.f32 %v939, %v1080
      %1082 = vmatprep.mubr.bf16.mxu0 0
      %1083 = vmatmul.mubr.bf16.gmra.mrb[0].mxu0 %v1026
      %v1084 = vpop.f32.mrb[0].mxu0
      %v1085 = vadd.f32 %v944, %v1084
      %v1086 = vpop.f32.mrb[0].mxu0
      %v1087 = vadd.f32 %v944, %v1086
      %v1088 = vpop.f32.mrb[0].mxu0
      %v1089 = vadd.f32 %v949, %v1088
      %v1090 = vpop.f32.mrb[0].mxu0
      %v1091 = vadd.f32 %v949, %v1090
      %1092 = vmatprep.mubr.bf16.mxu0 0
      %1093 = vmatmul.mubr.bf16.gmra.mrb[0].mxu0 %v1029
      %v1094 = vpop.f32.mrb[0].mxu0
      %v1095 = vadd.f32 %v954, %v1094
      %v1096 = vpop.f32.mrb[0].mxu0
      %v1097 = vadd.f32 %v954, %v1096
      %v1098 = vpop.f32.mrb[0].mxu0
      %v1099 = vadd.f32 %v959, %v1098
      %v1100 = vpop.f32.mrb[0].mxu0
      %v1101 = vadd.f32 %v959, %v1100
      %1102 = vmatprep.mubr.bf16.mxu0 0
      %1103 = vmatmul.mubr.bf16.gmra.mrb[0].mxu0 %v1032
      %v1104 = vpop.f32.mrb[0].mxu0
      %v1105 = vadd.f32 %v964, %v1104
      %v1106 = vpop.f32.mrb[0].mxu0
      %v1107 = vadd.f32 %v964, %v1106
      %v1108 = vpop.f32.mrb[0].mxu0
      %v1109 = vadd.f32 %v969, %v1108
      %v1110 = vpop.f32.mrb[0].mxu0
      %v1111 = vadd.f32 %v969, %v1110
      %1112 = vmatprep.mubr.bf16.mxu0 0
      %1113 = vmatmul.mubr.bf16.gmra.mrb[0].mxu0 %v1035
      %v1114 = vpop.f32.mrb[0].mxu0
      %v1115 = vadd.f32 %v974, %v1114
      %v1116 = vpop.f32.mrb[0].mxu0
      %v1117 = vadd.f32 %v974, %v1116
      %v1118 = vpop.f32.mrb[0].mxu0
      %v1119 = vadd.f32 %v979, %v1118
      %v1120 = vpop.f32.mrb[0].mxu0
      %v1121 = vadd.f32 %v979, %v1120
      %1122 = vmatprep.mubr.bf16.mxu0 0
      %1123 = vmatmul.mubr.bf16.gmra.mrb[0].mxu0 %v1038
      %v1124 = vpop.f32.mrb[0].mxu0
      %v1125 = vadd.f32 %v984, %v1124
      %v1126 = vpop.f32.mrb[0].mxu0
      %v1127 = vadd.f32 %v984, %v1126
      %v1128 = vpop.f32.mrb[0].mxu0
      %v1129 = vadd.f32 %v989, %v1128
      %v1130 = vpop.f32.mrb[0].mxu0
      %v1131 = vadd.f32 %v989, %v1130
      %1132 = vdwg.mxu0
      %1133 = vmatprep.subr.bf16.mxu0 %v898
      %1134 = vmatpush1.bf16.msra.mxu0 %v897
      %1135 = vmatprep.subr.bf16.mxu0 %v902
      %1136 = vmatpush1.bf16.msra.mxu0 %v901
      %1137 = vmatprep.subr.bf16.mxu0 %v906
      %1138 = vmatpush1.bf16.msra.mxu0 %v905
      %1139 = vmatprep.subr.bf16.mxu0 0
      %1140 = vmatpush1.bf16.msra.mxu0 0
      %1141 = vmatprep.subr.bf16.mxu0 0
      %1142 = vmatpush1.bf16.msra.mxu0 0
      %1143 = vmatprep.subr.bf16.mxu0 0
      %1144 = vmatpush1.bf16.msra.mxu0 0
      %1145 = vmatprep.subr.bf16.mxu0 0
      %1146 = vmatpush1.bf16.msra.mxu0 0
      %1147 = vmatprep.subr.bf16.mxu0 0
      %1148 = vmatpush1.bf16.msra.mxu0 0
      %1149 = vmatprep.subr.bf16.mxu0 0
      %1150 = vmatpush1.bf16.msra.mxu0 0
      %1151 = vmatprep.subr.bf16.mxu0 0
      %1152 = vmatpush1.bf16.msra.mxu0 0
      %1153 = vmatprep.subr.bf16.mxu0 0
      %1154 = vmatpush1.bf16.msra.mxu0 0
      %1155 = vmatprep.subr.bf16.mxu0 0
      %1156 = vmatpush1.bf16.msra.mxu0 0
      %1157 = vmatprep.subr.bf16.mxu0 0
      %1158 = vmatpush1.bf16.msra.mxu0 0
      %1159 = vmatprep.subr.bf16.mxu0 0
      %1160 = vmatpush1.bf16.msra.mxu0 0
      %1161 = vmatprep.subr.bf16.mxu0 0
      %1162 = vmatpush1.bf16.msra.mxu0 0
      %1163 = vmatprep.subr.bf16.mxu0 0
      %1164 = vmatpush1.bf16.msra.mxu0 0
      %1165 = vmatprep.mubr.bf16.mxu0 0
      %1166 = vmatmul.mubr.bf16.gmra.mrb[0].mxu0 %v1023
      %v1167 = vpop.f32.mrb[0].mxu0
      %v1168 = vadd.f32 %v934, %v1167
      %v1169 = vpop.f32.mrb[0].mxu0
      %v1170 = vadd.f32 %v934, %v1169
      %v1171 = vpop.f32.mrb[0].mxu0
      %v1172 = vadd.f32 %v939, %v1171
      %v1173 = vpop.f32.mrb[0].mxu0
      %v1174 = vadd.f32 %v939, %v1173
      %1175 = vmatprep.mubr.bf16.mxu0 0
      %1176 = vmatmul.mubr.bf16.gmra.mrb[0].mxu0 %v1026
      %v1177 = vpop.f32.mrb[0].mxu0
      %v1178 = vadd.f32 %v944, %v1177
      %v1179 = vpop.f32.mrb[0].mxu0
      %v1180 = vadd.f32 %v944, %v1179
      %v1181 = vpop.f32.mrb[0].mxu0
      %v1182 = vadd.f32 %v949, %v1181
      %v1183 = vpop.f32.mrb[0].mxu0
      %v1184 = vadd.f32 %v949, %v1183
      %1185 = vmatprep.mubr.bf16.mxu0 0
      %1186 = vmatmul.mubr.bf16.gmra.mrb[0].mxu0 %v1029
      %v1187 = vpop.f32.mrb[0].mxu0
      %v1188 = vadd.f32 %v954, %v1187
      %v1189 = vpop.f32.mrb[0].mxu0
      %v1190 = vadd.f32 %v954, %v1189
      %v1191 = vpop.f32.mrb[0].mxu0
      %v1192 = vadd.f32 %v959, %v1191
      %v1193 = vpop.f32.mrb[0].mxu0
      %v1194 = vadd.f32 %v959, %v1193
      %1195 = vmatprep.mubr.bf16.mxu0 0
      %1196 = vmatmul.mubr.bf16.gmra.mrb[0].mxu0 %v1032
      %v1197 = vpop.f32.mrb[0].mxu0
      %v1198 = vadd.f32 %v964, %v1197
      %v1199 = vpop.f32.mrb[0].mxu0
      %v1200 = vadd.f32 %v964, %v1199
      %v1201 = vpop.f32.mrb[0].mxu0
      %v1202 = vadd.f32 %v969, %v1201
      %v1203 = vpop.f32.mrb[0].mxu0
      %v1204 = vadd.f32 %v969, %v1203
      %1205 = vmatprep.mubr.bf16.mxu0 0
      %1206 = vmatmul.mubr.bf16.gmra.mrb[0].mxu0 %v1035
      %v1207 = vpop.f32.mrb[0].mxu0
      %v1208 = vadd.f32 %v974, %v1207
      %v1209 = vpop.f32.mrb[0].mxu0
      %v1210 = vadd.f32 %v974, %v1209
      %v1211 = vpop.f32.mrb[0].mxu0
      %v1212 = vadd.f32 %v979, %v1211
      %v1213 = vpop.f32.mrb[0].mxu0
      %v1214 = vadd.f32 %v979, %v1213
      %1215 = vmatprep.mubr.bf16.mxu0 0
      %1216 = vmatmul.mubr.bf16.gmra.mrb[0].mxu0 %v1038
      %v1217 = vpop.f32.mrb[0].mxu0
      %v1218 = vadd.f32 %v984, %v1217
      %v1219 = vpop.f32.mrb[0].mxu0
      %v1220 = vadd.f32 %v984, %v1219
      %v1221 = vpop.f32.mrb[0].mxu0
      %v1222 = vadd.f32 %v989, %v1221
      %v1223 = vpop.f32.mrb[0].mxu0
      %v1224 = vadd.f32 %v989, %v1223
      %1225 = vdwg.mxu0
      %v1226 = vmax.f32 %v1075, 0.0
      %v1227 = vmax.f32 %v1077, 0.0
      %v1228 = vmax.f32 %v1168, 0.0
      %v1229 = vmax.f32 %v1170, 0.0
      %v1230 = vmax.f32 %v1079, 0.0
      %v1231 = vmax.f32 %v1081, 0.0
      %v1232 = vmax.f32 %v1172, 0.0
      %v1233 = vmax.f32 %v1174, 0.0
      %v1234 = vmax.f32 %v1085, 0.0
      %v1235 = vmax.f32 %v1087, 0.0
      %v1236 = vmax.f32 %v1178, 0.0
      %v1237 = vmax.f32 %v1180, 0.0
      %v1238 = vmax.f32 %v1089, 0.0
      %v1239 = vmax.f32 %v1091, 0.0
      %v1240 = vmax.f32 %v1182, 0.0
      %v1241 = vmax.f32 %v1184, 0.0
      %v1242 = vmax.f32 %v1095, 0.0
      %v1243 = vmax.f32 %v1097, 0.0
      %v1244 = vmax.f32 %v1188, 0.0
      %v1245 = vmax.f32 %v1190, 0.0
      %v1246 = vmax.f32 %v1099, 0.0
      %v1247 = vmax.f32 %v1101, 0.0
      %v1248 = vmax.f32 %v1192, 0.0
      %v1249 = vmax.f32 %v1194, 0.0
      %v1250 = vmax.f32 %v1105, 0.0
      %v1251 = vmax.f32 %v1107, 0.0
      %v1252 = vmax.f32 %v1198, 0.0
      %v1253 = vmax.f32 %v1200, 0.0
      %v1254 = vmax.f32 %v1109, 0.0
      %v1255 = vmax.f32 %v1111, 0.0
      %v1256 = vmax.f32 %v1202, 0.0
      %v1257 = vmax.f32 %v1204, 0.0
      %v1258 = vmax.f32 %v1115, 0.0
      %v1259 = vmax.f32 %v1117, 0.0
      %v1260 = vmax.f32 %v1208, 0.0
      %v1261 = vmax.f32 %v1210, 0.0
      %v1262 = vmax.f32 %v1119, 0.0
      %v1263 = vmax.f32 %v1121, 0.0
      %v1264 = vmax.f32 %v1212, 0.0
      %v1265 = vmax.f32 %v1214, 0.0
      %v1266 = vmax.f32 %v1125, 0.0
      %v1267 = vmax.f32 %v1127, 0.0
      %v1268 = vmax.f32 %v1218, 0.0
      %v1269 = vmax.f32 %v1220, 0.0
      %v1270 = vmax.f32 %v1129, 0.0
      %v1271 = vmax.f32 %v1131, 0.0
      %v1272 = vmax.f32 %v1222, 0.0
      %v1273 = vmax.f32 %v1224, 0.0
      %v1274 = vpack.c.bf16 %v1230, %v1226
      %v1275 = vpack.c.bf16 %v1231, %v1227
      %v1276 = vpack.c.bf16 %v1232, %v1228
      %v1277 = vpack.c.bf16 %v1233, %v1229
      %v1278 = vpack.c.bf16 %v1238, %v1234
      %v1279 = vpack.c.bf16 %v1239, %v1235
      %v1280 = vpack.c.bf16 %v1240, %v1236
      %v1281 = vpack.c.bf16 %v1241, %v1237
      %v1282 = vpack.c.bf16 %v1246, %v1242
      %v1283 = vpack.c.bf16 %v1247, %v1243
      %v1284 = vpack.c.bf16 %v1248, %v1244
      %v1285 = vpack.c.bf16 %v1249, %v1245
      %v1286 = vpack.c.bf16 %v1254, %v1250
      %v1287 = vpack.c.bf16 %v1255, %v1251
      %v1288 = vpack.c.bf16 %v1256, %v1252
      %v1289 = vpack.c.bf16 %v1257, %v1253
      %v1290 = vpack.c.bf16 %v1262, %v1258
      %v1291 = vpack.c.bf16 %v1263, %v1259
      %v1292 = vpack.c.bf16 %v1264, %v1260
      %v1293 = vpack.c.bf16 %v1265, %v1261
      %v1294 = vpack.c.bf16 %v1270, %v1266
      %v1295 = vpack.c.bf16 %v1271, %v1267
      %v1296 = vpack.c.bf16 %v1272, %v1268
      %v1297 = vpack.c.bf16 %v1273, %v1269
      %v1298 = vld [vmem:[%s4] sm:$0xf]
      %v1299 = vld [vmem:[%s4 + $0x4] sm:$0x3]
      %v1302 = vunpack.c.l.b16 %v1298
      %v1303 = vunpack.c.l.b16 %v1299
      %v1304 = vpack.c.b16 %v1303, %v1302
      %vm1305 = vcmask 785408
      %v1307 = vsel %vm1305, %v1304, 0
      %1309 = vmatprep.subr.bf16.mxu0 %v1275
      %1310 = vmatpush1.bf16.msra.mxu0 %v1274
      %1311 = vmatprep.subr.bf16.mxu0 %v1279
      %1312 = vmatpush1.bf16.msra.mxu0 %v1278
      %1313 = vmatprep.subr.bf16.mxu0 %v1283
      %1314 = vmatpush1.bf16.msra.mxu0 %v1282
      %1315 = vmatprep.subr.bf16.mxu0 %v1287
      %1316 = vmatpush1.bf16.msra.mxu0 %v1286
      %1317 = vmatprep.subr.bf16.mxu0 %v1291
      %1318 = vmatpush1.bf16.msra.mxu0 %v1290
      %1319 = vmatprep.subr.bf16.mxu0 %v1295
      %1320 = vmatpush1.bf16.msra.mxu0 %v1294
      %1321 = vmatprep.subr.bf16.mxu0 0
      %1322 = vmatpush1.bf16.msra.mxu0 0
      %1323 = vmatprep.subr.bf16.mxu0 0
      %1324 = vmatpush1.bf16.msra.mxu0 0
      %1325 = vmatprep.subr.bf16.mxu0 0
      %1326 = vmatpush1.bf16.msra.mxu0 0
      %1327 = vmatprep.subr.bf16.mxu0 0
      %1328 = vmatpush1.bf16.msra.mxu0 0
      %1329 = vmatprep.subr.bf16.mxu0 0
      %1330 = vmatpush1.bf16.msra.mxu0 0
      %1331 = vmatprep.subr.bf16.mxu0 0
      %1332 = vmatpush1.bf16.msra.mxu0 0
      %1333 = vmatprep.subr.bf16.mxu0 0
      %1334 = vmatpush1.bf16.msra.mxu0 0
      %1335 = vmatprep.subr.bf16.mxu0 0
      %1336 = vmatpush1.bf16.msra.mxu0 0
      %1337 = vmatprep.subr.bf16.mxu0 0
      %1338 = vmatpush1.bf16.msra.mxu0 0
      %1339 = vmatprep.subr.bf16.mxu0 0
      %1340 = vmatpush1.bf16.msra.mxu0 0
      %1341 = vmatprep.mubr.bf16.mxu0 0
      %1342 = vmatmul.mubr.bf16.gmra.mrb[0].mxu0 %v1307
      %v1343 = vpop.f32.mrb[0].mxu0
      %v1344 = vadd.f32 0.0, %v1343
      %v1345 = vpop.f32.mrb[0].mxu0
      %v1346 = vadd.f32 0.0, %v1345
      %v1347 = vpop.f32.mrb[0].mxu0
      %v1348 = vadd.f32 0.0, %v1347
      %v1349 = vpop.f32.mrb[0].mxu0
      %v1350 = vadd.f32 0.0, %v1349
      %1351 = vdwg.mxu0
      %1352 = vmatprep.subr.bf16.mxu0 %v1277
      %1353 = vmatpush1.bf16.msra.mxu0 %v1276
      %1354 = vmatprep.subr.bf16.mxu0 %v1281
      %1355 = vmatpush1.bf16.msra.mxu0 %v1280
      %1356 = vmatprep.subr.bf16.mxu0 %v1285
      %1357 = vmatpush1.bf16.msra.mxu0 %v1284
      %1358 = vmatprep.subr.bf16.mxu0 %v1289
      %1359 = vmatpush1.bf16.msra.mxu0 %v1288
      %1360 = vmatprep.subr.bf16.mxu0 %v1293
      %1361 = vmatpush1.bf16.msra.mxu0 %v1292
      %1362 = vmatprep.subr.bf16.mxu0 %v1297
      %1363 = vmatpush1.bf16.msra.mxu0 %v1296
      %1364 = vmatprep.subr.bf16.mxu0 0
      %1365 = vmatpush1.bf16.msra.mxu0 0
      %1366 = vmatprep.subr.bf16.mxu0 0
      %1367 = vmatpush1.bf16.msra.mxu0 0
      %1368 = vmatprep.subr.bf16.mxu0 0
      %1369 = vmatpush1.bf16.msra.mxu0 0
      %1370 = vmatprep.subr.bf16.mxu0 0
      %1371 = vmatpush1.bf16.msra.mxu0 0
      %1372 = vmatprep.subr.bf16.mxu0 0
      %1373 = vmatpush1.bf16.msra.mxu0 0
      %1374 = vmatprep.subr.bf16.mxu0 0
      %1375 = vmatpush1.bf16.msra.mxu0 0
      %1376 = vmatprep.subr.bf16.mxu0 0
      %1377 = vmatpush1.bf16.msra.mxu0 0
      %1378 = vmatprep.subr.bf16.mxu0 0
      %1379 = vmatpush1.bf16.msra.mxu0 0
      %1380 = vmatprep.subr.bf16.mxu0 0
      %1381 = vmatpush1.bf16.msra.mxu0 0
      %1382 = vmatprep.subr.bf16.mxu0 0
      %1383 = vmatpush1.bf16.msra.mxu0 0
      %1384 = vmatprep.mubr.bf16.mxu0 0
      %1385 = vmatmul.mubr.bf16.gmra.mrb[0].mxu0 %v1307
      %v1386 = vpop.f32.mrb[0].mxu0
      %v1387 = vadd.f32 0.0, %v1386
      %v1388 = vpop.f32.mrb[0].mxu0
      %v1389 = vadd.f32 0.0, %v1388
      %v1390 = vpop.f32.mrb[0].mxu0
      %v1391 = vadd.f32 0.0, %v1390
      %v1392 = vpop.f32.mrb[0].mxu0
      %v1393 = vadd.f32 0.0, %v1392
      %1394 = vdwg.mxu0
      %v1395 = vld [vmem:[%s246] sm:$0x3]
      %v1397 = vlaneseq
      %v1398 = vshrl.u32 %v1397, 7
      %v1399 = vsub.s32 0, %v1398
      %v1400 = vrot.slane %v1395, %v1399
      %v1401 = vlaneseq
      %v1402 = vshrl.u32 %v1401, 7
      %v1403 = vsub.s32 1, %v1402
      %v1404 = vrot.slane %v1395, %v1403
      %v1407 = vmul.f32 %v1344, %v1400
      %v1408 = vmul.f32 %v1346, %v1404
      %v1409 = vmul.f32 %v1348, %v1400
      %v1410 = vmul.f32 %v1350, %v1404
      %v1411 = vadd.f32 %v287, %v1407
      %v1412 = vadd.f32 %v288, %v1408
      %v1413 = vadd.f32 %v289, %v1409
      %v1414 = vadd.f32 %v290, %v1410
      %1415 = vst [vmem:[%s253] sm:$0xff] %v1411
      %1416 = vst [vmem:[%s253 + $0x8] sm:$0xff] %v1412
      %1417 = vst [vmem:[%s253 + $0x10] sm:$0xf] %v1413
      %1418 = vst [vmem:[%s253 + $0x18] sm:$0xf] %v1414
      %s1419 = scalar_lea.vmem %s246, 2
      %v1420 = vld [vmem:[%s1419] sm:$0x3]
      %v1422 = vlaneseq
      %v1423 = vshrl.u32 %v1422, 7
      %v1424 = vsub.s32 0, %v1423
      %v1425 = vrot.slane %v1420, %v1424
      %v1426 = vlaneseq
      %v1427 = vshrl.u32 %v1426, 7
      %v1428 = vsub.s32 1, %v1427
      %v1429 = vrot.slane %v1420, %v1428
      %v1432 = vmul.f32 %v1387, %v1425
      %v1433 = vmul.f32 %v1389, %v1429
      %v1434 = vmul.f32 %v1391, %v1425
      %v1435 = vmul.f32 %v1393, %v1429
      %v1436 = vadd.f32 %v599, %v1432
      %v1437 = vadd.f32 %v600, %v1433
      %v1438 = vadd.f32 %v601, %v1434
      %v1439 = vadd.f32 %v602, %v1435
      %s1440 = scalar_lea.vmem %s253, 32
      %1441 = vst [vmem:[%s1440] sm:$0xff] %v1436
      %1442 = vst [vmem:[%s1440 + $0x8] sm:$0xff] %v1437
      %1443 = vst [vmem:[%s1440 + $0x10] sm:$0xf] %v1438
      %1444 = vst [vmem:[%s1440 + $0x18] sm:$0xf] %v1439
      %s1445 = smul.u32 2, %s16
      %p1446 = scmp.lt.s32.totalorder %s1445, 3
      %s1447 = scalar_select %p1446, %s1445, 3
      %s1448 = smul.addr %s1447, 4
      %s1449 = smul.addr %s1448, 8
      %s1450 = scalar_lea.vmem %s5, %s1449
      // Predicated region
      $region41: #{tpu_custom_call.1} parent=39 // pred_check
        %p1451 = pneg %p149
      $region42: #{tpu_custom_call.1} parent=39 // pred_check_branch
        %1453 = sbr.rel (%p1451) target = $region44
      $region43: #{tpu_custom_call.1} parent=39 // pred_region
        %s1454 = smul.u32 2, %s16
      $region44: #{tpu_custom_call.1} parent=39 // pred_fallthru
        _
    $region40: #{tpu_custom_call.1} parent=5 // pred_fallthru
      _
    %p1455 = scmp.le.s32.totalorder 2, %s11
    // Predicated region
    $region45: #{tpu_custom_call.1} parent=5 // pred_check
      %p1456 = pneg %p1455
    $region46: #{tpu_custom_call.1} parent=5 // pred_check_branch
      %1458 = sbr.rel (%p1456) target = $region48
    $region47: #{tpu_custom_call.1} parent=5 // pred_region
      %s1459 = ssub.s32 %s11, 2
      // Predicated region
      $region49: #{tpu_custom_call.1} parent=47 // pred_check
        %p1460 = pneg %p155
      $region50: #{tpu_custom_call.1} parent=47 // pred_check_branch
        %1462 = sbr.rel (%p1460) target = $region52
      $region51: #{tpu_custom_call.1} parent=47 // pred_region
        %s1463 = smul.u32 2, %s17
        %p1464 = scmp.lt.s32.totalorder %s1463, 3
        %s1465 = scalar_select %p1464, %s1463, 3
        %s1466 = smul.addr %s1465, 4
        %s1467 = smul.addr %s1466, 8
        %s1468 = scalar_lea.vmem %s5, %s1467
      $region52: #{tpu_custom_call.1} parent=47 // pred_fallthru
        _
    $region48: #{tpu_custom_call.1} parent=5 // pred_fallthru
      _
  $region6: #{tpu_custom_call.1} parent=0 // loop_footer
    %s15 = sadd.s32 1, %s11
  $region7: #{tpu_custom_call.1} parent=0 // loop_footer_branch
    %10 = sbr.rel target = $region3
  $region8: #{tpu_custom_call.1} parent=0 // loop_exit
    _

</llo_original>
